<compile_context>
chip_gen: v7x
topology: tpu7x:2x2x1
jax: 0.10.0
libtpu: 0.0.40
codegen_flags: <defaults>
</compile_context>

<pallas_src>
import functools

import numpy as np
import jax
import jax.numpy as jnp
from jax import lax
from jax.experimental import pallas as pl
from jax.experimental.pallas import tpu as pltpu

EPS = 1e-5


def _lane_shift(a, d):
    """out[:, i] = a[:, (i + d) % Q].

    The wrap-around columns only ever land on ring / dead (masked) columns of
    the padded-flattened grid, so a plain rotation implements the shifted tap.
    Implemented as two static lane slices + concat (== jnp.roll / pltpu.roll).
    """
    q = a.shape[1]
    s = (-d) % q
    if s == 0:
        return a
    return jnp.concatenate([a[:, q - s:], a[:, :q - s]], axis=1)


def fused_stem_kernel(x_ref, patches_ref, pmask_ref, vmask_ref,
                      w1t_ref, wd_ref, w2_ref, prm_ref, o_ref,
                      *, n_bn0, n_valid, k, kp, wpad, cin):
    f32 = jnp.float32
    vmask = vmask_ref[...]                                      # (1, Q) valid-column mask
    inv_v = 1.0 / n_valid

    # ---- BN0: batch stats of the raw input, folded onto the patches ----
    x = x_ref[...]                                              # (Cin, N*H*W)
    mu0 = jnp.sum(x, axis=1, keepdims=True) * (1.0 / n_bn0)     # (Cin, 1)
    var0 = jnp.sum(x * x, axis=1, keepdims=True) * (1.0 / n_bn0) - mu0 * mu0
    s0 = prm_ref[0:cin, 0:1] * lax.rsqrt(var0 + EPS)            # per-channel scale
    t0 = prm_ref[0:cin, 1:2] - mu0 * s0                         # per-channel shift
    reps = [s0] * (k // cin)
    rept = [t0] * (k // cin)
    if kp > k:
        zpad = jnp.zeros((kp - k, 1), f32)
        reps.append(zpad)
        rept.append(zpad)
    s0k = jnp.concatenate(reps, axis=0)                         # (Kp, 1), row = tap*Cin+ci
    t0k = jnp.concatenate(rept, axis=0)                         # (Kp, 1)
    # pmask keeps the conv3x3 zero-padding exact: pad pixels stay 0 after BN0.
    patches_bn = patches_ref[...] * s0k + t0k * pmask_ref[...]  # (Kp, Q)

    # ---- Conv3x3 stride-2 (MXU matmul, channels-first) + BN1 + ReLU ----
    z1 = jnp.dot(w1t_ref[...], patches_bn, preferred_element_type=f32)   # (C0, Q)
    z1m = z1 * vmask
    mu1 = jnp.sum(z1m, axis=1, keepdims=True) * inv_v
    var1 = jnp.sum(z1m * z1m, axis=1, keepdims=True) * inv_v - mu1 * mu1
    sc1 = prm_ref[:, 2:3] * lax.rsqrt(var1 + EPS)
    sh1 = prm_ref[:, 3:4] - mu1 * sc1
    # *vmask: ring / dead columns back to 0 == the depthwise conv's zero padding.
    y1 = jnp.maximum(z1 * sc1 + sh1, 0.0) * vmask               # (C0, Q)

    # ---- Depthwise 3x3 stride-1: 9 static lane shifts of the padded grid ----
    acc = jnp.zeros_like(y1)
    for kh in range(3):
        for kw in range(3):
            d = (kh - 1) * wpad + (kw - 1)
            tap = kh * 3 + kw
            acc = acc + wd_ref[:, tap:tap + 1] * _lane_shift(y1, d)
    accm = acc * vmask
    mu2 = jnp.sum(accm, axis=1, keepdims=True) * inv_v
    var2 = jnp.sum(accm * accm, axis=1, keepdims=True) * inv_v - mu2 * mu2
    sc2 = prm_ref[:, 4:5] * lax.rsqrt(var2 + EPS)
    sh2 = prm_ref[:, 5:6] - mu2 * sc2
    y2 = jnp.maximum(acc * sc2 + sh2, 0.0)                      # (C0, Q)

    # ---- Conv1x1 (MXU) + BN3 + ReLU; lane-dense (C1, Q) store ----
    z3 = jnp.dot(w2_ref[...], y2, preferred_element_type=f32)   # (C1, Q)
    c1 = z3.shape[0]
    z3m = z3 * vmask
    mu3 = jnp.sum(z3m, axis=1, keepdims=True) * inv_v
    var3 = jnp.sum(z3m * z3m, axis=1, keepdims=True) * inv_v - mu3 * mu3
    sc3 = prm_ref[0:c1, 6:7] * lax.rsqrt(var3 + EPS)
    sh3 = prm_ref[0:c1, 7:8] - mu3 * sc3
    o_ref[...] = jnp.maximum(z3 * sc3 + sh3, 0.0)


# ------------------------------ Forward pass ------------------------------

def primary_module_forward(x_nchw, p):
    N, Cin, H, W = x_nchw.shape
    C0 = p['w1'].shape[0]                       # 32
    C1 = p['w2'].shape[0]                       # 16
    Ho, Wo = H // 2, W // 2
    Hp, Wp = Ho + 2, Wo + 2                     # padded depthwise grid
    PQ = max(128, ((Hp * Wp + 127) // 128) * 128)   # per-image columns, lane aligned
    Q = N * PQ
    K = 9 * Cin
    Kp = ((K + 7) // 8) * 8                     # padded contraction dim
    NV = N * Ho * Wo                            # valid output positions
    f32 = jnp.float32

    # (1) channels-first flattened raw input, for in-kernel BN0 stats
    x_cf = jnp.transpose(x_nchw, (1, 0, 2, 3)).reshape(Cin, N * H * W)

    # (2) stride-2 im2col of the RAW input scattered into padded dw-grid columns
    xpad = jnp.pad(x_nchw, ((0, 0), (0, 0), (1, 1), (1, 1)))
    taps = [xpad[:, :, kh:kh + 2 * Ho:2, kw:kw + 2 * Wo:2]          # (N,Cin,Ho,Wo)
            for kh in range(3) for kw in range(3)]
    pt = jnp.transpose(jnp.stack(taps, axis=0), (0, 2, 1, 3, 4))    # (9,Cin,N,Ho,Wo)
    pt = pt.reshape(K, N, Ho, Wo)
    pg = jnp.zeros((K, N, Hp, Wp), f32).at[:, :, 1:1 + Ho, 1:1 + Wo].set(pt)
    pg = jnp.pad(pg.reshape(K, N, Hp * Wp),
                 ((0, Kp - K), (0, 0), (0, PQ - Hp * Wp)))
    patches = pg.reshape(Kp, Q)                                     # (Kp, Q)

    # (3) compile-time masks (pure numpy constants)
    ones_pad = np.zeros((H + 2, W + 2), np.float32)
    ones_pad[1:1 + H, 1:1 + W] = 1.0
    pm = np.zeros((Kp, N, Hp, Wp), np.float32)
    for kh in range(3):
        for kw in range(3):
            tap_valid = ones_pad[kh:kh + 2 * Ho:2, kw:kw + 2 * Wo:2]    # (Ho,Wo)
            for ci in range(Cin):
                pm[(kh * 3 + kw) * Cin + ci, :, 1:1 + Ho, 1:1 + Wo] = tap_valid[None]
    pm = np.pad(pm.reshape(Kp, N, Hp * Wp), ((0, 0), (0, 0), (0, PQ - Hp * Wp)))
    pmask = jnp.asarray(pm.reshape(Kp, Q))

    vm = np.zeros((N, Hp, Wp), np.float32)
    vm[:, 1:1 + Ho, 1:1 + Wo] = 1.0
    vm = np.pad(vm.reshape(N, Hp * Wp), ((0, 0), (0, PQ - Hp * Wp)))
    vmask = jnp.asarray(vm.reshape(1, Q))

    # (4) weights in kernel layouts
    w1t = jnp.transpose(p['w1'], (0, 2, 3, 1)).reshape(C0, K)       # col=(kh*3+kw)*Cin+ci
    w1t = jnp.pad(w1t, ((0, 0), (0, Kp - K)))
    wd_cf = p['wd'].reshape(C0, 9)                                  # col = kh*3+kw
    w2 = p['w2'][:, :, 0, 0]                                        # (C1, C0)

    # (5) BN affine params packed into one small table
    prm = jnp.zeros((C0, 8), f32)
    prm = prm.at[:Cin, 0].set(p['g0']).at[:Cin, 1].set(p['b0'])
    prm = prm.at[:, 2].set(p['g1']).at[:, 3].set(p['b1'])
    prm = prm.at[:, 4].set(p['g2']).at[:, 5].set(p['b2'])
    prm = prm.at[:C1, 6].set(p['g3']).at[:C1, 7].set(p['b3'])

    kernel = functools.partial(
        fused_stem_kernel,
        n_bn0=N * H * W, n_valid=NV, k=K, kp=Kp, wpad=Wp, cin=Cin)

    out_t = pl.pallas_call(
        kernel,
        out_shape=jax.ShapeDtypeStruct((C1, Q), f32),
        in_specs=[pl.BlockSpec(memory_space=pltpu.MemorySpace.VMEM)] * 8,
        out_specs=pl.BlockSpec(memory_space=pltpu.MemorySpace.VMEM),
    )(x_cf, patches, pmask, vmask, w1t, wd_cf, w2, prm)

    # (6) lane-dense (C1, Q) kernel output -> NCHW (thin XLA glue)
    out = out_t.reshape(C1, N, PQ)[:, :, :Hp * Wp].reshape(C1, N, Hp, Wp)
    out = out[:, :, 1:1 + Ho, 1:1 + Wo]                             # (C1, N, Ho, Wo)
    return jnp.transpose(out, (1, 0, 2, 3))                         # (N, C1, Ho, Wo)


# ------------------------- pure-JAX reference model ------------------------

def reference_forward(x, p):
    def bn(x, g, b):
        m = x.mean(axis=(0, 2, 3), keepdims=True)
        v = ((x - m) ** 2).mean(axis=(0, 2, 3), keepdims=True)
        return (x - m) / jnp.sqrt(v + EPS) * g.reshape(1, -1, 1, 1) + b.reshape(1, -1, 1, 1)

    y = bn(x, p['g0'], p['b0'])
    y = lax.conv_general_dilated(y, p['w1'], (2, 2), ((1, 1), (1, 1)),
                                 dimension_numbers=('NCHW', 'OIHW', 'NCHW'))
    y = jax.nn.relu(bn(y, p['g1'], p['b1']))
    y = lax.conv_general_dilated(y, p['wd'], (1, 1), ((1, 1), (1, 1)),
                                 dimension_numbers=('NCHW', 'OIHW', 'NCHW'),
                                 feature_group_count=p['wd'].shape[0])
    y = jax.nn.relu(bn(y, p['g2'], p['b2']))
    y = lax.conv_general_dilated(y, p['w2'], (1, 1), ((0, 0), (0, 0)),
                                 dimension_numbers=('NCHW', 'OIHW', 'NCHW'))
    y = jax.nn.relu(bn(y, p['g3'], p['b3']))
    return y


# ---------------------------------- main -----------------------------------

if __name__ == "__main__":
    key = jax.random.PRNGKey(0)
    ks = jax.random.split(key, 13)
    Cin, C0, C1 = 3, 32, 16
    p = {
        'g0': 1.0 + 0.1 * jax.random.normal(ks[0], (Cin,), jnp.float32),
        'b0': 0.1 * jax.random.normal(ks[1], (Cin,), jnp.float32),
        'w1': 0.1 * jax.random.normal(ks[2], (C0, Cin, 3, 3), jnp.float32),
        'g1': 1.0 + 0.1 * jax.random.normal(ks[3], (C0,), jnp.float32),
        'b1': 0.1 * jax.random.normal(ks[4], (C0,), jnp.float32),
        'wd': 0.1 * jax.random.normal(ks[5], (C0, 1, 3, 3), jnp.float32),
        'g2': 1.0 + 0.1 * jax.random.normal(ks[6], (C0,), jnp.float32),
        'b2': 0.1 * jax.random.normal(ks[7], (C0,), jnp.float32),
        'w2': 0.1 * jax.random.normal(ks[8], (C1, C0, 1, 1), jnp.float32),
        'g3': 1.0 + 0.1 * jax.random.normal(ks[9], (C1,), jnp.float32),
        'b3': 0.1 * jax.random.normal(ks[10], (C1,), jnp.float32),
    }
    x = jax.random.normal(ks[11], (2, Cin, 16, 16), jnp.float32)   # NCHW, like PyTorch

    out = jax.jit(primary_module_forward)(x, p)
    out = jax.block_until_ready(out)
    assert out.shape == (2, C1, 8, 8), out.shape

    ref = reference_forward(x, p)
    err = float(jnp.max(jnp.abs(out - ref)))
    assert err < 2e-3, f"max abs error {err}"

    print("KERNEL_OK")
</pallas_src>

<mosaic_0001>
module attributes {stable_mosaic.version = 11 : i64} {
  func.func @fused_stem_kernel(%arg0: memref<3x512xf32, #tpu.memory_space<vmem>>, %arg1: memref<32x256xf32, #tpu.memory_space<vmem>>, %arg2: memref<32x256xf32, #tpu.memory_space<vmem>>, %arg3: memref<1x256xf32, #tpu.memory_space<vmem>>, %arg4: memref<32x32xf32, #tpu.memory_space<vmem>>, %arg5: memref<32x9xf32, #tpu.memory_space<vmem>>, %arg6: memref<16x32xf32, #tpu.memory_space<vmem>>, %arg7: memref<32x8xf32, #tpu.memory_space<vmem>>, %arg8: memref<16x256xf32, #tpu.memory_space<vmem>>) attributes {dimension_semantics = [], scalar_prefetch = 0 : i64, scratch_operands = 0 : i64, tpu.core_type = #tpu.core_type<tc>} {
    %c0 = arith.constant 0 : index
    %c0_0 = arith.constant 0 : index
    %0 = vector.load %arg3[%c0, %c0_0] : memref<1x256xf32, #tpu.memory_space<vmem>>, vector<1x256xf32>
    %c0_1 = arith.constant 0 : index
    %c0_2 = arith.constant 0 : index
    %1 = vector.load %arg0[%c0_1, %c0_2] : memref<3x512xf32, #tpu.memory_space<vmem>>, vector<3x512xf32>
    %cst = arith.constant dense<0.000000e+00> : vector<3xf32>
    %2 = vector.multi_reduction <add>, %1, %cst [1] : vector<3x512xf32> to vector<3xf32>
    %3 = vector.shape_cast %2 : vector<3xf32> to vector<3x1xf32>
    %cst_3 = arith.constant 0.001953125 : f32
    %4 = vector.broadcast %cst_3 : f32 to vector<3x1xf32>
    %5 = arith.mulf %3, %4 : vector<3x1xf32>
    %6 = arith.mulf %1, %1 : vector<3x512xf32>
    %cst_4 = arith.constant dense<0.000000e+00> : vector<3xf32>
    %7 = vector.multi_reduction <add>, %6, %cst_4 [1] : vector<3x512xf32> to vector<3xf32>
    %8 = vector.shape_cast %7 : vector<3xf32> to vector<3x1xf32>
    %cst_5 = arith.constant 0.001953125 : f32
    %9 = vector.broadcast %cst_5 : f32 to vector<3x1xf32>
    %10 = arith.mulf %8, %9 : vector<3x1xf32>
    %11 = arith.mulf %5, %5 : vector<3x1xf32>
    %12 = arith.subf %10, %11 : vector<3x1xf32>
    %c0_6 = arith.constant 0 : index
    %c0_7 = arith.constant 0 : index
    %13 = vector.load %arg7[%c0_6, %c0_7] : memref<32x8xf32, #tpu.memory_space<vmem>>, vector<3x1xf32>
    %cst_8 = arith.constant 9.99999974E-6 : f32
    %14 = vector.broadcast %cst_8 : f32 to vector<3x1xf32>
    %15 = arith.addf %12, %14 : vector<3x1xf32>
    %16 = math.rsqrt %15 : vector<3x1xf32>
    %17 = arith.mulf %13, %16 : vector<3x1xf32>
    %c0_9 = arith.constant 0 : index
    %c1 = arith.constant 1 : index
    %18 = vector.load %arg7[%c0_9, %c1] : memref<32x8xf32, #tpu.memory_space<vmem>>, vector<3x1xf32>
    %19 = arith.mulf %5, %17 : vector<3x1xf32>
    %20 = arith.subf %18, %19 : vector<3x1xf32>
    %cst_10 = arith.constant 0.000000e+00 : f32
    %21 = vector.broadcast %cst_10 : f32 to vector<5x1xf32>
    %22 = tpu.concatenate %17, %17, %17, %17, %17, %17, %17, %17, %17, %21 in 0 : vector<3x1xf32>, vector<3x1xf32>, vector<3x1xf32>, vector<3x1xf32>, vector<3x1xf32>, vector<3x1xf32>, vector<3x1xf32>, vector<3x1xf32>, vector<3x1xf32>, vector<5x1xf32> -> vector<32x1xf32>
    %23 = tpu.concatenate %20, %20, %20, %20, %20, %20, %20, %20, %20, %21 in 0 : vector<3x1xf32>, vector<3x1xf32>, vector<3x1xf32>, vector<3x1xf32>, vector<3x1xf32>, vector<3x1xf32>, vector<3x1xf32>, vector<3x1xf32>, vector<3x1xf32>, vector<5x1xf32> -> vector<32x1xf32>
    %c0_11 = arith.constant 0 : index
    %c0_12 = arith.constant 0 : index
    %24 = vector.load %arg1[%c0_11, %c0_12] : memref<32x256xf32, #tpu.memory_space<vmem>>, vector<32x256xf32>
    %25 = vector.broadcast %22 : vector<32x1xf32> to vector<32x256xf32>
    %26 = arith.mulf %24, %25 : vector<32x256xf32>
    %c0_13 = arith.constant 0 : index
    %c0_14 = arith.constant 0 : index
    %27 = vector.load %arg2[%c0_13, %c0_14] : memref<32x256xf32, #tpu.memory_space<vmem>>, vector<32x256xf32>
    %28 = vector.broadcast %23 : vector<32x1xf32> to vector<32x256xf32>
    %29 = arith.mulf %28, %27 : vector<32x256xf32>
    %30 = arith.addf %26, %29 : vector<32x256xf32>
    %c0_15 = arith.constant 0 : index
    %c0_16 = arith.constant 0 : index
    %31 = vector.load %arg4[%c0_15, %c0_16] : memref<32x32xf32, #tpu.memory_space<vmem>>, vector<32x32xf32>
    %cst_17 = arith.constant dense<0.000000e+00> : vector<32x256xf32>
    %32 = tpu.matmul %31, %30, %cst_17 {dimension_numbers = #tpu.dot_dimension_numbers<[1], [0], [0], [1], [0, 0, 1, 1], [], []>} : vector<32x32xf32>, vector<32x256xf32>, vector<32x256xf32> -> vector<32x256xf32>
    %33 = vector.broadcast %0 : vector<1x256xf32> to vector<32x256xf32>
    %34 = arith.mulf %32, %33 : vector<32x256xf32>
    %cst_18 = arith.constant dense<0.000000e+00> : vector<32xf32>
    %35 = vector.multi_reduction <add>, %34, %cst_18 [1] : vector<32x256xf32> to vector<32xf32>
    %36 = vector.shape_cast %35 : vector<32xf32> to vector<32x1xf32>
    %cst_19 = arith.constant 7.812500e-03 : f32
    %37 = vector.broadcast %cst_19 : f32 to vector<32x1xf32>
    %38 = arith.mulf %36, %37 : vector<32x1xf32>
    %39 = arith.mulf %34, %34 : vector<32x256xf32>
    %cst_20 = arith.constant dense<0.000000e+00> : vector<32xf32>
    %40 = vector.multi_reduction <add>, %39, %cst_20 [1] : vector<32x256xf32> to vector<32xf32>
    %41 = vector.shape_cast %40 : vector<32xf32> to vector<32x1xf32>
    %cst_21 = arith.constant 7.812500e-03 : f32
    %42 = vector.broadcast %cst_21 : f32 to vector<32x1xf32>
    %43 = arith.mulf %41, %42 : vector<32x1xf32>
    %44 = arith.mulf %38, %38 : vector<32x1xf32>
    %45 = arith.subf %43, %44 : vector<32x1xf32>
    %c0_22 = arith.constant 0 : index
    %c2 = arith.constant 2 : index
    %46 = vector.load %arg7[%c0_22, %c2] : memref<32x8xf32, #tpu.memory_space<vmem>>, vector<32x1xf32>
    %cst_23 = arith.constant 9.99999974E-6 : f32
    %47 = vector.broadcast %cst_23 : f32 to vector<32x1xf32>
    %48 = arith.addf %45, %47 : vector<32x1xf32>
    %49 = math.rsqrt %48 : vector<32x1xf32>
    %50 = arith.mulf %46, %49 : vector<32x1xf32>
    %c0_24 = arith.constant 0 : index
    %c3 = arith.constant 3 : index
    %51 = vector.load %arg7[%c0_24, %c3] : memref<32x8xf32, #tpu.memory_space<vmem>>, vector<32x1xf32>
    %52 = arith.mulf %38, %50 : vector<32x1xf32>
    %53 = arith.subf %51, %52 : vector<32x1xf32>
    %54 = vector.broadcast %50 : vector<32x1xf32> to vector<32x256xf32>
    %55 = arith.mulf %32, %54 : vector<32x256xf32>
    %56 = vector.broadcast %53 : vector<32x1xf32> to vector<32x256xf32>
    %57 = arith.addf %55, %56 : vector<32x256xf32>
    %cst_25 = arith.constant 0.000000e+00 : f32
    %58 = vector.broadcast %cst_25 : f32 to vector<32x256xf32>
    %59 = arith.maximumf %57, %58 : vector<32x256xf32>
    %60 = vector.broadcast %0 : vector<1x256xf32> to vector<32x256xf32>
    %61 = arith.mulf %59, %60 : vector<32x256xf32>
    %cst_26 = arith.constant 0.000000e+00 : f32
    %62 = vector.broadcast %cst_26 : f32 to vector<32x256xf32>
    %c0_27 = arith.constant 0 : index
    %c0_28 = arith.constant 0 : index
    %63 = vector.load %arg5[%c0_27, %c0_28] : memref<32x9xf32, #tpu.memory_space<vmem>>, vector<32x1xf32>
    %64 = vector.extract_strided_slice %61 {offsets = [0, 245], sizes = [32, 11], strides = [1, 1]} : vector<32x256xf32> to vector<32x11xf32>
    %65 = vector.extract_strided_slice %61 {offsets = [0, 0], sizes = [32, 245], strides = [1, 1]} : vector<32x256xf32> to vector<32x245xf32>
    %66 = tpu.concatenate %64, %65 in 1 : vector<32x11xf32>, vector<32x245xf32> -> vector<32x256xf32>
    %67 = vector.broadcast %63 : vector<32x1xf32> to vector<32x256xf32>
    %68 = arith.mulf %67, %66 : vector<32x256xf32>
    %69 = arith.addf %62, %68 : vector<32x256xf32>
    %c0_29 = arith.constant 0 : index
    %c1_30 = arith.constant 1 : index
    %70 = vector.load %arg5[%c0_29, %c1_30] : memref<32x9xf32, #tpu.memory_space<vmem>>, vector<32x1xf32>
    %71 = vector.extract_strided_slice %61 {offsets = [0, 246], sizes = [32, 10], strides = [1, 1]} : vector<32x256xf32> to vector<32x10xf32>
    %72 = vector.extract_strided_slice %61 {offsets = [0, 0], sizes = [32, 246], strides = [1, 1]} : vector<32x256xf32> to vector<32x246xf32>
    %73 = tpu.concatenate %71, %72 in 1 : vector<32x10xf32>, vector<32x246xf32> -> vector<32x256xf32>
    %74 = vector.broadcast %70 : vector<32x1xf32> to vector<32x256xf32>
    %75 = arith.mulf %74, %73 : vector<32x256xf32>
    %76 = arith.addf %69, %75 : vector<32x256xf32>
    %c0_31 = arith.constant 0 : index
    %c2_32 = arith.constant 2 : index
    %77 = vector.load %arg5[%c0_31, %c2_32] : memref<32x9xf32, #tpu.memory_space<vmem>>, vector<32x1xf32>
    %78 = vector.extract_strided_slice %61 {offsets = [0, 247], sizes = [32, 9], strides = [1, 1]} : vector<32x256xf32> to vector<32x9xf32>
    %79 = vector.extract_strided_slice %61 {offsets = [0, 0], sizes = [32, 247], strides = [1, 1]} : vector<32x256xf32> to vector<32x247xf32>
    %80 = tpu.concatenate %78, %79 in 1 : vector<32x9xf32>, vector<32x247xf32> -> vector<32x256xf32>
    %81 = vector.broadcast %77 : vector<32x1xf32> to vector<32x256xf32>
    %82 = arith.mulf %81, %80 : vector<32x256xf32>
    %83 = arith.addf %76, %82 : vector<32x256xf32>
    %c0_33 = arith.constant 0 : index
    %c3_34 = arith.constant 3 : index
    %84 = vector.load %arg5[%c0_33, %c3_34] : memref<32x9xf32, #tpu.memory_space<vmem>>, vector<32x1xf32>
    %85 = vector.extract_strided_slice %61 {offsets = [0, 255], sizes = [32, 1], strides = [1, 1]} : vector<32x256xf32> to vector<32x1xf32>
    %86 = vector.extract_strided_slice %61 {offsets = [0, 0], sizes = [32, 255], strides = [1, 1]} : vector<32x256xf32> to vector<32x255xf32>
    %87 = tpu.concatenate %85, %86 in 1 : vector<32x1xf32>, vector<32x255xf32> -> vector<32x256xf32>
    %88 = vector.broadcast %84 : vector<32x1xf32> to vector<32x256xf32>
    %89 = arith.mulf %88, %87 : vector<32x256xf32>
    %90 = arith.addf %83, %89 : vector<32x256xf32>
    %c0_35 = arith.constant 0 : index
    %c4 = arith.constant 4 : index
    %91 = vector.load %arg5[%c0_35, %c4] : memref<32x9xf32, #tpu.memory_space<vmem>>, vector<32x1xf32>
    %92 = vector.broadcast %91 : vector<32x1xf32> to vector<32x256xf32>
    %93 = arith.mulf %92, %61 : vector<32x256xf32>
    %94 = arith.addf %90, %93 : vector<32x256xf32>
    %c0_36 = arith.constant 0 : index
    %c5 = arith.constant 5 : index
    %95 = vector.load %arg5[%c0_36, %c5] : memref<32x9xf32, #tpu.memory_space<vmem>>, vector<32x1xf32>
    %96 = vector.extract_strided_slice %61 {offsets = [0, 1], sizes = [32, 255], strides = [1, 1]} : vector<32x256xf32> to vector<32x255xf32>
    %97 = vector.extract_strided_slice %61 {offsets = [0, 0], sizes = [32, 1], strides = [1, 1]} : vector<32x256xf32> to vector<32x1xf32>
    %98 = tpu.concatenate %96, %97 in 1 : vector<32x255xf32>, vector<32x1xf32> -> vector<32x256xf32>
    %99 = vector.broadcast %95 : vector<32x1xf32> to vector<32x256xf32>
    %100 = arith.mulf %99, %98 : vector<32x256xf32>
    %101 = arith.addf %94, %100 : vector<32x256xf32>
    %c0_37 = arith.constant 0 : index
    %c6 = arith.constant 6 : index
    %102 = vector.load %arg5[%c0_37, %c6] : memref<32x9xf32, #tpu.memory_space<vmem>>, vector<32x1xf32>
    %103 = vector.extract_strided_slice %61 {offsets = [0, 9], sizes = [32, 247], strides = [1, 1]} : vector<32x256xf32> to vector<32x247xf32>
    %104 = vector.extract_strided_slice %61 {offsets = [0, 0], sizes = [32, 9], strides = [1, 1]} : vector<32x256xf32> to vector<32x9xf32>
    %105 = tpu.concatenate %103, %104 in 1 : vector<32x247xf32>, vector<32x9xf32> -> vector<32x256xf32>
    %106 = vector.broadcast %102 : vector<32x1xf32> to vector<32x256xf32>
    %107 = arith.mulf %106, %105 : vector<32x256xf32>
    %108 = arith.addf %101, %107 : vector<32x256xf32>
    %c0_38 = arith.constant 0 : index
    %c7 = arith.constant 7 : index
    %109 = vector.load %arg5[%c0_38, %c7] : memref<32x9xf32, #tpu.memory_space<vmem>>, vector<32x1xf32>
    %110 = vector.extract_strided_slice %61 {offsets = [0, 10], sizes = [32, 246], strides = [1, 1]} : vector<32x256xf32> to vector<32x246xf32>
    %111 = vector.extract_strided_slice %61 {offsets = [0, 0], sizes = [32, 10], strides = [1, 1]} : vector<32x256xf32> to vector<32x10xf32>
    %112 = tpu.concatenate %110, %111 in 1 : vector<32x246xf32>, vector<32x10xf32> -> vector<32x256xf32>
    %113 = vector.broadcast %109 : vector<32x1xf32> to vector<32x256xf32>
    %114 = arith.mulf %113, %112 : vector<32x256xf32>
    %115 = arith.addf %108, %114 : vector<32x256xf32>
    %c0_39 = arith.constant 0 : index
    %c8 = arith.constant 8 : index
    %116 = vector.load %arg5[%c0_39, %c8] : memref<32x9xf32, #tpu.memory_space<vmem>>, vector<32x1xf32>
    %117 = vector.extract_strided_slice %61 {offsets = [0, 11], sizes = [32, 245], strides = [1, 1]} : vector<32x256xf32> to vector<32x245xf32>
    %118 = vector.extract_strided_slice %61 {offsets = [0, 0], sizes = [32, 11], strides = [1, 1]} : vector<32x256xf32> to vector<32x11xf32>
    %119 = tpu.concatenate %117, %118 in 1 : vector<32x245xf32>, vector<32x11xf32> -> vector<32x256xf32>
    %120 = vector.broadcast %116 : vector<32x1xf32> to vector<32x256xf32>
    %121 = arith.mulf %120, %119 : vector<32x256xf32>
    %122 = arith.addf %115, %121 : vector<32x256xf32>
    %123 = vector.broadcast %0 : vector<1x256xf32> to vector<32x256xf32>
    %124 = arith.mulf %122, %123 : vector<32x256xf32>
    %cst_40 = arith.constant dense<0.000000e+00> : vector<32xf32>
    %125 = vector.multi_reduction <add>, %124, %cst_40 [1] : vector<32x256xf32> to vector<32xf32>
    %126 = vector.shape_cast %125 : vector<32xf32> to vector<32x1xf32>
    %cst_41 = arith.constant 7.812500e-03 : f32
    %127 = vector.broadcast %cst_41 : f32 to vector<32x1xf32>
    %128 = arith.mulf %126, %127 : vector<32x1xf32>
    %129 = arith.mulf %124, %124 : vector<32x256xf32>
    %cst_42 = arith.constant dense<0.000000e+00> : vector<32xf32>
    %130 = vector.multi_reduction <add>, %129, %cst_42 [1] : vector<32x256xf32> to vector<32xf32>
    %131 = vector.shape_cast %130 : vector<32xf32> to vector<32x1xf32>
    %cst_43 = arith.constant 7.812500e-03 : f32
    %132 = vector.broadcast %cst_43 : f32 to vector<32x1xf32>
    %133 = arith.mulf %131, %132 : vector<32x1xf32>
    %134 = arith.mulf %128, %128 : vector<32x1xf32>
    %135 = arith.subf %133, %134 : vector<32x1xf32>
    %c0_44 = arith.constant 0 : index
    %c4_45 = arith.constant 4 : index
    %136 = vector.load %arg7[%c0_44, %c4_45] : memref<32x8xf32, #tpu.memory_space<vmem>>, vector<32x1xf32>
    %cst_46 = arith.constant 9.99999974E-6 : f32
    %137 = vector.broadcast %cst_46 : f32 to vector<32x1xf32>
    %138 = arith.addf %135, %137 : vector<32x1xf32>
    %139 = math.rsqrt %138 : vector<32x1xf32>
    %140 = arith.mulf %136, %139 : vector<32x1xf32>
    %c0_47 = arith.constant 0 : index
    %c5_48 = arith.constant 5 : index
    %141 = vector.load %arg7[%c0_47, %c5_48] : memref<32x8xf32, #tpu.memory_space<vmem>>, vector<32x1xf32>
    %142 = arith.mulf %128, %140 : vector<32x1xf32>
    %143 = arith.subf %141, %142 : vector<32x1xf32>
    %144 = vector.broadcast %140 : vector<32x1xf32> to vector<32x256xf32>
    %145 = arith.mulf %122, %144 : vector<32x256xf32>
    %146 = vector.broadcast %143 : vector<32x1xf32> to vector<32x256xf32>
    %147 = arith.addf %145, %146 : vector<32x256xf32>
    %cst_49 = arith.constant 0.000000e+00 : f32
    %148 = vector.broadcast %cst_49 : f32 to vector<32x256xf32>
    %149 = arith.maximumf %147, %148 : vector<32x256xf32>
    %c0_50 = arith.constant 0 : index
    %c0_51 = arith.constant 0 : index
    %150 = vector.load %arg6[%c0_50, %c0_51] : memref<16x32xf32, #tpu.memory_space<vmem>>, vector<16x32xf32>
    %cst_52 = arith.constant dense<0.000000e+00> : vector<16x256xf32>
    %151 = tpu.matmul %150, %149, %cst_52 {dimension_numbers = #tpu.dot_dimension_numbers<[1], [0], [0], [1], [0, 0, 1, 1], [], []>} : vector<16x32xf32>, vector<32x256xf32>, vector<16x256xf32> -> vector<16x256xf32>
    %152 = vector.broadcast %0 : vector<1x256xf32> to vector<16x256xf32>
    %153 = arith.mulf %151, %152 : vector<16x256xf32>
    %cst_53 = arith.constant dense<0.000000e+00> : vector<16xf32>
    %154 = vector.multi_reduction <add>, %153, %cst_53 [1] : vector<16x256xf32> to vector<16xf32>
    %155 = vector.shape_cast %154 : vector<16xf32> to vector<16x1xf32>
    %cst_54 = arith.constant 7.812500e-03 : f32
    %156 = vector.broadcast %cst_54 : f32 to vector<16x1xf32>
    %157 = arith.mulf %155, %156 : vector<16x1xf32>
    %158 = arith.mulf %153, %153 : vector<16x256xf32>
    %cst_55 = arith.constant dense<0.000000e+00> : vector<16xf32>
    %159 = vector.multi_reduction <add>, %158, %cst_55 [1] : vector<16x256xf32> to vector<16xf32>
    %160 = vector.shape_cast %159 : vector<16xf32> to vector<16x1xf32>
    %cst_56 = arith.constant 7.812500e-03 : f32
    %161 = vector.broadcast %cst_56 : f32 to vector<16x1xf32>
    %162 = arith.mulf %160, %161 : vector<16x1xf32>
    %163 = arith.mulf %157, %157 : vector<16x1xf32>
    %164 = arith.subf %162, %163 : vector<16x1xf32>
    %c0_57 = arith.constant 0 : index
    %c6_58 = arith.constant 6 : index
    %165 = vector.load %arg7[%c0_57, %c6_58] : memref<32x8xf32, #tpu.memory_space<vmem>>, vector<16x1xf32>
    %cst_59 = arith.constant 9.99999974E-6 : f32
    %166 = vector.broadcast %cst_59 : f32 to vector<16x1xf32>
    %167 = arith.addf %164, %166 : vector<16x1xf32>
    %168 = math.rsqrt %167 : vector<16x1xf32>
    %169 = arith.mulf %165, %168 : vector<16x1xf32>
    %c0_60 = arith.constant 0 : index
    %c7_61 = arith.constant 7 : index
    %170 = vector.load %arg7[%c0_60, %c7_61] : memref<32x8xf32, #tpu.memory_space<vmem>>, vector<16x1xf32>
    %171 = arith.mulf %157, %169 : vector<16x1xf32>
    %172 = arith.subf %170, %171 : vector<16x1xf32>
    %173 = vector.broadcast %169 : vector<16x1xf32> to vector<16x256xf32>
    %174 = arith.mulf %151, %173 : vector<16x256xf32>
    %175 = vector.broadcast %172 : vector<16x1xf32> to vector<16x256xf32>
    %176 = arith.addf %174, %175 : vector<16x256xf32>
    %cst_62 = arith.constant 0.000000e+00 : f32
    %177 = vector.broadcast %cst_62 : f32 to vector<16x256xf32>
    %178 = arith.maximumf %176, %177 : vector<16x256xf32>
    %c0_63 = arith.constant 0 : index
    %c0_64 = arith.constant 0 : index
    %179 = vector.load %arg8[%c0_63, %c0_64] : memref<16x256xf32, #tpu.memory_space<vmem>>, vector<16x256xf32>
    tpu.vector_store %arg8[%c0_63, %c0_64], %178 {strides = array<i32>} : memref<16x256xf32, #tpu.memory_space<vmem>>, vector<16x256xf32>,
    return
  }
}

</mosaic_0001>

<llo_original>
// kernel: primary_module_forward.1
$region0: #{primary_module_forward.1}
  #allocation0 [shape = 'u32[]', space=smem, size = 0x4, offset = 0x4, fixed_abs, tag = 'smem constant byte address 0x4 - core index']
  #allocation1 [shape = 'u32[144,128]{1,0:T(1,128)}', space=vmem, size = 0x12000, scoped, tag = 'internal scratch']
  %s0 = inlined_call_operand.vmem [shape: f32[3,512], index: 0, kind: input, shape index: {}]
  %s1 = inlined_call_operand.vmem [shape: f32[32,256], index: 1, kind: input, shape index: {}]
  %s2 = inlined_call_operand.vmem [shape: f32[32,256], index: 2, kind: input, shape index: {}]
  %s3 = inlined_call_operand.vmem [shape: f32[1,256], index: 3, kind: input, shape index: {}]
  %s4 = inlined_call_operand.vmem [shape: f32[32,32], index: 4, kind: input, shape index: {}]
  %s5 = inlined_call_operand.vmem [shape: f32[32,9], index: 5, kind: input, shape index: {}]
  %s6 = inlined_call_operand.vmem [shape: f32[16,32], index: 6, kind: input, shape index: {}]
  %s7 = inlined_call_operand.vmem [shape: f32[32,8], index: 7, kind: input, shape index: {}]
  %s8 = inlined_call_operand.vmem [shape: f32[16,256], index: 8, kind: output, shape index: {}]
  %s9 = sld [smem:[#allocation0]]
  $region42: #{primary_module_forward.1} parent=0
    _
  %s11 = ssub.s32 1, %s9
  %s12 = scalar_select 0, %s11, %s9
  // Predicated region
  $region2: #{primary_module_forward.1} parent=0 // pred_check
    _
  $region3: #{primary_module_forward.1} parent=0 // pred_check_branch
    %14 = sbr.rel (0) target = $region5
  $region4: #{primary_module_forward.1} parent=0 // pred_region
    _
  $region5: #{primary_module_forward.1} parent=0 // pred_fallthru
    _
  // Predicated region
  $region6: #{primary_module_forward.1} parent=0 // pred_check
    _
  $region7: #{primary_module_forward.1} parent=0 // pred_check_branch
    %16 = sbr.rel (0) target = $region9
  $region8: #{primary_module_forward.1} parent=0 // pred_region
    _
  $region9: #{primary_module_forward.1} parent=0 // pred_fallthru
    _
  // Predicated region
  $region10: #{primary_module_forward.1} parent=0 // pred_check
    _
  $region11: #{primary_module_forward.1} parent=0 // pred_check_branch
    %18 = sbr.rel (0) target = $region13
  $region12: #{primary_module_forward.1} parent=0 // pred_region
    _
  $region13: #{primary_module_forward.1} parent=0 // pred_fallthru
    _
  // Predicated region
  $region14: #{primary_module_forward.1} parent=0 // pred_check
    _
  $region15: #{primary_module_forward.1} parent=0 // pred_check_branch
    %20 = sbr.rel (0) target = $region17
  $region16: #{primary_module_forward.1} parent=0 // pred_region
    _
  $region17: #{primary_module_forward.1} parent=0 // pred_fallthru
    _
  // Predicated region
  $region18: #{primary_module_forward.1} parent=0 // pred_check
    _
  $region19: #{primary_module_forward.1} parent=0 // pred_check_branch
    %22 = sbr.rel (0) target = $region21
  $region20: #{primary_module_forward.1} parent=0 // pred_region
    _
  $region21: #{primary_module_forward.1} parent=0 // pred_fallthru
    _
  // Predicated region
  $region22: #{primary_module_forward.1} parent=0 // pred_check
    _
  $region23: #{primary_module_forward.1} parent=0 // pred_check_branch
    %24 = sbr.rel (0) target = $region25
  $region24: #{primary_module_forward.1} parent=0 // pred_region
    _
  $region25: #{primary_module_forward.1} parent=0 // pred_fallthru
    _
  // Predicated region
  $region26: #{primary_module_forward.1} parent=0 // pred_check
    _
  $region27: #{primary_module_forward.1} parent=0 // pred_check_branch
    %26 = sbr.rel (0) target = $region29
  $region28: #{primary_module_forward.1} parent=0 // pred_region
    _
  $region29: #{primary_module_forward.1} parent=0 // pred_fallthru
    _
  // Predicated region
  $region30: #{primary_module_forward.1} parent=0 // pred_check
    _
  $region31: #{primary_module_forward.1} parent=0 // pred_check_branch
    %28 = sbr.rel (0) target = $region33
  $region32: #{primary_module_forward.1} parent=0 // pred_region
    _
  $region33: #{primary_module_forward.1} parent=0 // pred_fallthru
    _
  %v29 = vld [vmem:[%s3] sm:$0x3]
  %v30 = vld [vmem:[%s0] sm:$0x77]
  %v31 = vld [vmem:[%s0 + $0x8] sm:$0x77]
  %v34 = vcombine.high %v30, %v30
  %v35 = vcombine.high %v31, %v31
  %vm38 = vcmask 1042432
  %v39 = vsel %vm38, %v30, 0.0
  %v40 = vsel %vm38, %v34, 0.0
  %v41 = vadd.f32 %v39, %v40
  %v42 = vsel %vm38, %v31, 0.0
  %v43 = vadd.f32 %v41, %v42
  %v44 = vsel %vm38, %v35, 0.0
  %v45 = vadd.f32 %v43, %v44
  %46 = vadd.xlane.f32.xlu0 %v45
  %v47 = vpop.xlane.xlu0 %46
  %v48 = vmul.f32 %v47, 0.001953125
  %v49 = vmul.f32 %v30, %v30
  %v50 = vmul.f32 %v31, %v31
  %v53 = vcombine.high %v49, %v49
  %v54 = vcombine.high %v50, %v50
  %v57 = vsel %vm38, %v49, 0.0
  %v58 = vsel %vm38, %v53, 0.0
  %v59 = vadd.f32 %v57, %v58
  %v60 = vsel %vm38, %v50, 0.0
  %v61 = vadd.f32 %v59, %v60
  %v62 = vsel %vm38, %v54, 0.0
  %v63 = vadd.f32 %v61, %v62
  %64 = vadd.xlane.f32.xlu0 %v63
  %v65 = vpop.xlane.xlu0 %64
  %v66 = vmul.f32 %v65, 0.001953125
  %v67 = vmul.f32 %v48, %v48
  %v68 = vsub.f32 %v66, %v67
  %v69 = vld [vmem:[%s7] sm:$0x7]
  %v70 = vadd.f32 %v68, 1e-05
  %v71 = vrsqrt.pop %v70
  %v72 = vmul.f32 %v69, %v71
  %v73 = vmul.f32 %v48, %v72
  %75 = vrot.lane.b32.xlu0 %v73, 1
  %v76 = vpop.permute.xlu0 %75
  %v78 = vsub.f32 %v69, %v76
  %v80 = vrot.slane %v72, 5
  %v82 = vrot.slane %v72, 2
  %v84 = vrot.slane %v72, 7
  %v86 = vrot.slane %v72, 4
  %v88 = vrot.slane %v72, 1
  %v90 = vrot.slane %v72, 6
  %v92 = vrot.slane %v72, 3
  %v94 = vsel %vm38, %v72, %v80
  %vm95 = vcmask 1045504
  %v96 = vsel %vm95, %v94, %v82
  %vm97 = vcmask 1040384
  %v98 = vsel %vm97, %v82, %v84
  %vm99 = vcmask 1043456
  %v100 = vsel %vm99, %v98, %v86
  %vm101 = vcmask 1046528
  %v102 = vsel %vm101, %v100, %v88
  %vm103 = vcmask 1041408
  %v104 = vsel %vm103, %v88, %v90
  %vm105 = vcmask 1044480
  %v106 = vsel %vm105, %v104, %v92
  %v107 = vsel %vm38, %v72, 0.0
  %v109 = vrot.slane %v78, 5
  %v111 = vrot.slane %v78, 2
  %v113 = vrot.slane %v78, 7
  %v115 = vrot.slane %v78, 4
  %v117 = vrot.slane %v78, 1
  %v119 = vrot.slane %v78, 6
  %v121 = vrot.slane %v78, 3
  %v123 = vsel %vm38, %v78, %v109
  %v124 = vsel %vm95, %v123, %v111
  %v125 = vsel %vm97, %v111, %v113
  %v126 = vsel %vm99, %v125, %v115
  %v127 = vsel %vm101, %v126, %v117
  %v128 = vsel %vm103, %v117, %v119
  %v129 = vsel %vm105, %v128, %v121
  %v130 = vsel %vm38, %v78, 0.0
  %v131 = vld [vmem:[%s1] sm:$0xff]
  %v132 = vld [vmem:[%s1 + $0x8] sm:$0xff]
  %v133 = vld [vmem:[%s1 + $0x10] sm:$0xff]
  %v134 = vld [vmem:[%s1 + $0x18] sm:$0xff]
  %v135 = vld [vmem:[%s1 + $0x20] sm:$0xff]
  %v136 = vld [vmem:[%s1 + $0x28] sm:$0xff]
  %v137 = vld [vmem:[%s1 + $0x30] sm:$0xff]
  %v138 = vld [vmem:[%s1 + $0x38] sm:$0xff]
  %140 = vset.pattern.permute.xlu0 0
  %141 = vperm.xlu0 %140, %v96
  %v142 = vpop.permute.xlu0 %141
  %145 = vset.pattern.permute.xlu0 0
  %146 = vperm.xlu0 %145, %v102
  %v147 = vpop.permute.xlu0 %146
  %150 = vset.pattern.permute.xlu0 0
  %151 = vperm.xlu0 %150, %v106
  %v152 = vpop.permute.xlu0 %151
  %155 = vset.pattern.permute.xlu0 0
  %156 = vperm.xlu0 %155, %v107
  %v157 = vpop.permute.xlu0 %156
  %v159 = vmul.f32 %v131, %v142
  %v160 = vmul.f32 %v132, %v142
  %v161 = vmul.f32 %v133, %v147
  %v162 = vmul.f32 %v134, %v147
  %v163 = vmul.f32 %v135, %v152
  %v164 = vmul.f32 %v136, %v152
  %v165 = vmul.f32 %v137, %v157
  %v166 = vmul.f32 %v138, %v157
  %v167 = vld [vmem:[%s2] sm:$0xff]
  %v168 = vld [vmem:[%s2 + $0x8] sm:$0xff]
  %v169 = vld [vmem:[%s2 + $0x10] sm:$0xff]
  %v170 = vld [vmem:[%s2 + $0x18] sm:$0xff]
  %v171 = vld [vmem:[%s2 + $0x20] sm:$0xff]
  %v172 = vld [vmem:[%s2 + $0x28] sm:$0xff]
  %v173 = vld [vmem:[%s2 + $0x30] sm:$0xff]
  %v174 = vld [vmem:[%s2 + $0x38] sm:$0xff]
  %176 = vset.pattern.permute.xlu0 1
  %177 = vperm.xlu0 %176, %v124
  %v178 = vpop.permute.xlu0 %177
  %181 = vset.pattern.permute.xlu0 1
  %182 = vperm.xlu0 %181, %v127
  %v183 = vpop.permute.xlu0 %182
  %186 = vset.pattern.permute.xlu0 1
  %187 = vperm.xlu0 %186, %v129
  %v188 = vpop.permute.xlu0 %187
  %191 = vset.pattern.permute.xlu0 1
  %192 = vperm.xlu0 %191, %v130
  %v193 = vpop.permute.xlu0 %192
  %v195 = vmul.f32 %v178, %v167
  %v196 = vmul.f32 %v178, %v168
  %v197 = vmul.f32 %v183, %v169
  %v198 = vmul.f32 %v183, %v170
  %v199 = vmul.f32 %v188, %v171
  %v200 = vmul.f32 %v188, %v172
  %v201 = vmul.f32 %v193, %v173
  %v202 = vmul.f32 %v193, %v174
  %v203 = vadd.f32 %v159, %v195
  %v204 = vadd.f32 %v160, %v196
  %v205 = vadd.f32 %v161, %v197
  %v206 = vadd.f32 %v162, %v198
  %v207 = vadd.f32 %v163, %v199
  %v208 = vadd.f32 %v164, %v200
  %v209 = vadd.f32 %v165, %v201
  %v210 = vadd.f32 %v166, %v202
  %v211 = vld [vmem:[%s4] sm:$0xff]
  %v212 = vld [vmem:[%s4 + $0x8] sm:$0xff]
  %v213 = vld [vmem:[%s4 + $0x10] sm:$0xff]
  %v214 = vld [vmem:[%s4 + $0x18] sm:$0xff]
  %vm215 = vcmask 261120
  %v217 = vsel %vm215, %v211, 0
  %v220 = vsel %vm215, %v212, 0
  %v223 = vsel %vm215, %v213, 0
  %v226 = vsel %vm215, %v214, 0
  %228 = vmatprep.subr.mxu0 %v204
  %229 = vmatpush1.msra.mxu0 %v203
  %230 = vmatprep.subr.mxu0 %v206
  %231 = vmatpush1.msra.mxu0 %v205
  %232 = vmatprep.subr.mxu0 %v208
  %233 = vmatpush1.msra.mxu0 %v207
  %234 = vmatprep.subr.mxu0 %v210
  %235 = vmatpush1.msra.mxu0 %v209
  %236 = vmatprep.subr.mxu0 0.0
  %237 = vmatpush1.msra.mxu0 0.0
  %238 = vmatprep.subr.mxu0 0.0
  %239 = vmatpush1.msra.mxu0 0.0
  %240 = vmatprep.subr.mxu0 0.0
  %241 = vmatpush1.msra.mxu0 0.0
  %242 = vmatprep.subr.mxu0 0.0
  %243 = vmatpush1.msra.mxu0 0.0
  %244 = vmatprep.subr.mxu0 0.0
  %245 = vmatpush1.msra.mxu0 0.0
  %246 = vmatprep.subr.mxu0 0.0
  %247 = vmatpush1.msra.mxu0 0.0
  %248 = vmatprep.subr.mxu0 0.0
  %249 = vmatpush1.msra.mxu0 0.0
  %250 = vmatprep.subr.mxu0 0.0
  %251 = vmatpush1.msra.mxu0 0.0
  %252 = vmatprep.subr.mxu0 0.0
  %253 = vmatpush1.msra.mxu0 0.0
  %254 = vmatprep.subr.mxu0 0.0
  %255 = vmatpush1.msra.mxu0 0.0
  %256 = vmatprep.subr.mxu0 0.0
  %257 = vmatpush1.msra.mxu0 0.0
  %258 = vmatprep.subr.mxu0 0.0
  %259 = vmatpush1.msra.mxu0 0.0
  %260 = vmatprep.subr.mxu0 0.0
  %261 = vmatpush1.msra.mxu0 0.0
  %262 = vmatprep.subr.mxu0 0.0
  %263 = vmatpush1.msra.mxu0 0.0
  %264 = vmatprep.subr.mxu0 0.0
  %265 = vmatpush1.msra.mxu0 0.0
  %266 = vmatprep.subr.mxu0 0.0
  %267 = vmatpush1.msra.mxu0 0.0
  %268 = vmatprep.subr.mxu0 0.0
  %269 = vmatpush1.msra.mxu0 0.0
  %270 = vmatprep.subr.mxu0 0.0
  %271 = vmatpush1.msra.mxu0 0.0
  %272 = vmatprep.subr.mxu0 0.0
  %273 = vmatpush1.msra.mxu0 0.0
  %274 = vmatprep.subr.mxu0 0.0
  %275 = vmatpush1.msra.mxu0 0.0
  %276 = vmatprep.subr.mxu0 0.0
  %277 = vmatpush1.msra.mxu0 0.0
  %278 = vmatprep.subr.mxu0 0.0
  %279 = vmatpush1.msra.mxu0 0.0
  %280 = vmatprep.subr.mxu0 0.0
  %281 = vmatpush1.msra.mxu0 0.0
  %282 = vmatprep.subr.mxu0 0.0
  %283 = vmatpush1.msra.mxu0 0.0
  %284 = vmatprep.subr.mxu0 0.0
  %285 = vmatpush1.msra.mxu0 0.0
  %286 = vmatprep.subr.mxu0 0.0
  %287 = vmatpush1.msra.mxu0 0.0
  %288 = vmatprep.subr.mxu0 0.0
  %289 = vmatpush1.msra.mxu0 0.0
  %290 = vmatprep.subr.mxu0 0.0
  %291 = vmatpush1.msra.mxu0 0.0
  %292 = vmatprep.mubr.f32.mxu0 0.0
  %293 = vmatmul.mubr.f32.gmra.mrb[0].mxu0 %v217
  %v294 = vpop.f32.mrb[0].mxu0
  %v295 = vadd.f32 0.0, %v294
  %v296 = vpop.f32.mrb[0].mxu0
  %v297 = vadd.f32 0.0, %v296
  %298 = vmatprep.mubr.f32.mxu0 0.0
  %299 = vmatmul.mubr.f32.gmra.mrb[0].mxu0 %v220
  %v300 = vpop.f32.mrb[0].mxu0
  %v301 = vadd.f32 0.0, %v300
  %v302 = vpop.f32.mrb[0].mxu0
  %v303 = vadd.f32 0.0, %v302
  %304 = vmatprep.mubr.f32.mxu0 0.0
  %305 = vmatmul.mubr.f32.gmra.mrb[0].mxu0 %v223
  %v306 = vpop.f32.mrb[0].mxu0
  %v307 = vadd.f32 0.0, %v306
  %v308 = vpop.f32.mrb[0].mxu0
  %v309 = vadd.f32 0.0, %v308
  %310 = vmatprep.mubr.f32.mxu0 0.0
  %311 = vmatmul.mubr.f32.gmra.mrb[0].mxu0 %v226
  %v312 = vpop.f32.mrb[0].mxu0
  %v313 = vadd.f32 0.0, %v312
  %v314 = vpop.f32.mrb[0].mxu0
  %v315 = vadd.f32 0.0, %v314
  %316 = vdwg.mxu0
  %v318 = vlaneseq
  %v319 = vshrl.u32 %v318, 7
  %v320 = vsub.s32 0, %v319
  %v321 = vrot.slane %v29, %v320
  %v322 = vlaneseq
  %v323 = vshrl.u32 %v322, 7
  %v324 = vsub.s32 1, %v323
  %v325 = vrot.slane %v29, %v324
  %v328 = vmul.f32 %v295, %v321
  %v329 = vmul.f32 %v297, %v325
  %v330 = vmul.f32 %v301, %v321
  %v331 = vmul.f32 %v303, %v325
  %v332 = vmul.f32 %v307, %v321
  %v333 = vmul.f32 %v309, %v325
  %v334 = vmul.f32 %v313, %v321
  %v335 = vmul.f32 %v315, %v325
  %v336 = vadd.f32 %v328, %v329
  %337 = vadd.xlane.f32.xlu0 %v336
  %v338 = vpop.xlane.xlu0 %337
  %v339 = vadd.f32 %v330, %v331
  %340 = vadd.xlane.f32.xlu0 %v339
  %v341 = vpop.xlane.xlu0 %340
  %v342 = vadd.f32 %v332, %v333
  %343 = vadd.xlane.f32.xlu0 %v342
  %v344 = vpop.xlane.xlu0 %343
  %v345 = vadd.f32 %v334, %v335
  %346 = vadd.xlane.f32.xlu0 %v345
  %v347 = vpop.xlane.xlu0 %346
  %v348 = vmul.f32 %v338, 0.0078125
  %v349 = vmul.f32 %v341, 0.0078125
  %v350 = vmul.f32 %v344, 0.0078125
  %v351 = vmul.f32 %v347, 0.0078125
  %v352 = vmul.f32 %v328, %v328
  %v353 = vmul.f32 %v329, %v329
  %v354 = vmul.f32 %v330, %v330
  %v355 = vmul.f32 %v331, %v331
  %v356 = vmul.f32 %v332, %v332
  %v357 = vmul.f32 %v333, %v333
  %v358 = vmul.f32 %v334, %v334
  %v359 = vmul.f32 %v335, %v335
  %v360 = vadd.f32 %v352, %v353
  %361 = vadd.xlane.f32.xlu0 %v360
  %v362 = vpop.xlane.xlu0 %361
  %v363 = vadd.f32 %v354, %v355
  %364 = vadd.xlane.f32.xlu0 %v363
  %v365 = vpop.xlane.xlu0 %364
  %v366 = vadd.f32 %v356, %v357
  %367 = vadd.xlane.f32.xlu0 %v366
  %v368 = vpop.xlane.xlu0 %367
  %v369 = vadd.f32 %v358, %v359
  %370 = vadd.xlane.f32.xlu0 %v369
  %v371 = vpop.xlane.xlu0 %370
  %v372 = vmul.f32 %v362, 0.0078125
  %v373 = vmul.f32 %v365, 0.0078125
  %v374 = vmul.f32 %v368, 0.0078125
  %v375 = vmul.f32 %v371, 0.0078125
  %v376 = vmul.f32 %v348, %v348
  %v377 = vmul.f32 %v349, %v349
  %v378 = vmul.f32 %v350, %v350
  %v379 = vmul.f32 %v351, %v351
  %v380 = vsub.f32 %v372, %v376
  %v381 = vsub.f32 %v373, %v377
  %v382 = vsub.f32 %v374, %v378
  %v383 = vsub.f32 %v375, %v379
  %v384 = vld [vmem:[%s7] sm:$0xff]
  %v385 = vld [vmem:[%s7 + $0x8] sm:$0xff]
  %v386 = vld [vmem:[%s7 + $0x10] sm:$0xff]
  %v387 = vld [vmem:[%s7 + $0x18] sm:$0xff]
  %v388 = vadd.f32 %v380, 1e-05
  %v389 = vadd.f32 %v381, 1e-05
  %v390 = vadd.f32 %v382, 1e-05
  %v391 = vadd.f32 %v383, 1e-05
  %v392 = vrsqrt.pop %v388
  %v393 = vrsqrt.pop %v389
  %v394 = vrsqrt.pop %v390
  %v395 = vrsqrt.pop %v391
  %v396 = vmul.f32 %v384, %v392
  %v397 = vmul.f32 %v385, %v393
  %v398 = vmul.f32 %v386, %v394
  %v399 = vmul.f32 %v387, %v395
  %v400 = vmul.f32 %v348, %v396
  %v401 = vmul.f32 %v349, %v397
  %v402 = vmul.f32 %v350, %v398
  %v403 = vmul.f32 %v351, %v399
  %408 = vrot.lane.b32.xlu0 %v400, 1
  %v409 = vpop.permute.xlu0 %408
  %410 = vrot.lane.b32.xlu0 %v401, 1
  %v411 = vpop.permute.xlu0 %410
  %412 = vrot.lane.b32.xlu0 %v402, 1
  %v413 = vpop.permute.xlu0 %412
  %414 = vrot.lane.b32.xlu0 %v403, 1
  %v415 = vpop.permute.xlu0 %414
  %v420 = vsub.f32 %v384, %v409
  %v421 = vsub.f32 %v385, %v411
  %v422 = vsub.f32 %v386, %v413
  %v423 = vsub.f32 %v387, %v415
  %425 = vset.pattern.permute.xlu0 2
  %426 = vperm.xlu0 %425, %v396
  %v427 = vpop.permute.xlu0 %426
  %430 = vset.pattern.permute.xlu0 2
  %431 = vperm.xlu0 %430, %v397
  %v432 = vpop.permute.xlu0 %431
  %435 = vset.pattern.permute.xlu0 2
  %436 = vperm.xlu0 %435, %v398
  %v437 = vpop.permute.xlu0 %436
  %440 = vset.pattern.permute.xlu0 2
  %441 = vperm.xlu0 %440, %v399
  %v442 = vpop.permute.xlu0 %441
  %v444 = vmul.f32 %v295, %v427
  %v445 = vmul.f32 %v297, %v427
  %v446 = vmul.f32 %v301, %v432
  %v447 = vmul.f32 %v303, %v432
  %v448 = vmul.f32 %v307, %v437
  %v449 = vmul.f32 %v309, %v437
  %v450 = vmul.f32 %v313, %v442
  %v451 = vmul.f32 %v315, %v442
  %453 = vset.pattern.permute.xlu0 3
  %454 = vperm.xlu0 %453, %v420
  %v455 = vpop.permute.xlu0 %454
  %458 = vset.pattern.permute.xlu0 3
  %459 = vperm.xlu0 %458, %v421
  %v460 = vpop.permute.xlu0 %459
  %463 = vset.pattern.permute.xlu0 3
  %464 = vperm.xlu0 %463, %v422
  %v465 = vpop.permute.xlu0 %464
  %468 = vset.pattern.permute.xlu0 3
  %469 = vperm.xlu0 %468, %v423
  %v470 = vpop.permute.xlu0 %469
  %v472 = vadd.f32 %v444, %v455
  %v473 = vadd.f32 %v445, %v455
  %v474 = vadd.f32 %v446, %v460
  %v475 = vadd.f32 %v447, %v460
  %v476 = vadd.f32 %v448, %v465
  %v477 = vadd.f32 %v449, %v465
  %v478 = vadd.f32 %v450, %v470
  %v479 = vadd.f32 %v451, %v470
  %v480 = vmax.f32 %v472, 0.0
  %v481 = vmax.f32 %v473, 0.0
  %v482 = vmax.f32 %v474, 0.0
  %v483 = vmax.f32 %v475, 0.0
  %v484 = vmax.f32 %v476, 0.0
  %v485 = vmax.f32 %v477, 0.0
  %v486 = vmax.f32 %v478, 0.0
  %v487 = vmax.f32 %v479, 0.0
  %v488 = vmul.f32 %v480, %v321
  %v489 = vmul.f32 %v481, %v325
  %v490 = vmul.f32 %v482, %v321
  %v491 = vmul.f32 %v483, %v325
  %v492 = vmul.f32 %v484, %v321
  %v493 = vmul.f32 %v485, %v325
  %v494 = vmul.f32 %v486, %v321
  %v495 = vmul.f32 %v487, %v325
  %v496 = vld [vmem:[%s5] sm:$0xff]
  %v497 = vld [vmem:[%s5 + $0x8] sm:$0xff]
  %v498 = vld [vmem:[%s5 + $0x10] sm:$0xff]
  %v499 = vld [vmem:[%s5 + $0x18] sm:$0xff]
  %504 = vrot.lane.b32.xlu0 %v489, 11
  %v505 = vpop.permute.xlu0 %504
  %506 = vrot.lane.b32.xlu0 %v491, 11
  %v507 = vpop.permute.xlu0 %506
  %508 = vrot.lane.b32.xlu0 %v493, 11
  %v509 = vpop.permute.xlu0 %508
  %510 = vrot.lane.b32.xlu0 %v495, 11
  %v511 = vpop.permute.xlu0 %510
  %520 = vrot.lane.b32.xlu0 %v488, 11
  %v521 = vpop.permute.xlu0 %520
  %522 = vrot.lane.b32.xlu0 %v490, 11
  %v523 = vpop.permute.xlu0 %522
  %524 = vrot.lane.b32.xlu0 %v492, 11
  %v525 = vpop.permute.xlu0 %524
  %526 = vrot.lane.b32.xlu0 %v494, 11
  %v527 = vpop.permute.xlu0 %526
  %vm528 = vcmask 89088
  %v529 = vsel %vm528, %v521, %v505
  %v530 = vsel %vm528, %v523, %v507
  %v531 = vsel %vm528, %v525, %v509
  %v532 = vsel %vm528, %v527, %v511
  %v541 = vsel %vm528, %v505, %v521
  %v542 = vsel %vm528, %v507, %v523
  %v543 = vsel %vm528, %v509, %v525
  %v544 = vsel %vm528, %v511, %v527
  %546 = vset.pattern.permute.xlu0 0
  %547 = vperm.xlu0 %546, %v496
  %v548 = vpop.permute.xlu0 %547
  %551 = vset.pattern.permute.xlu0 0
  %552 = vperm.xlu0 %551, %v497
  %v553 = vpop.permute.xlu0 %552
  %556 = vset.pattern.permute.xlu0 0
  %557 = vperm.xlu0 %556, %v498
  %v558 = vpop.permute.xlu0 %557
  %561 = vset.pattern.permute.xlu0 0
  %562 = vperm.xlu0 %561, %v499
  %v563 = vpop.permute.xlu0 %562
  %v565 = vmul.f32 %v548, %v541
  %v566 = vmul.f32 %v548, %v529
  %v567 = vmul.f32 %v553, %v542
  %v568 = vmul.f32 %v553, %v530
  %v569 = vmul.f32 %v558, %v543
  %v570 = vmul.f32 %v558, %v531
  %v571 = vmul.f32 %v563, %v544
  %v572 = vmul.f32 %v563, %v532
  %v573 = vadd.f32 %v565, 0.0
  %v574 = vadd.f32 %v566, 0.0
  %v575 = vadd.f32 %v567, 0.0
  %v576 = vadd.f32 %v568, 0.0
  %v577 = vadd.f32 %v569, 0.0
  %v578 = vadd.f32 %v570, 0.0
  %v579 = vadd.f32 %v571, 0.0
  %v580 = vadd.f32 %v572, 0.0
  %581 = vrot.lane.b32.xlu0 %v489, 10
  %v582 = vpop.permute.xlu0 %581
  %583 = vrot.lane.b32.xlu0 %v491, 10
  %v584 = vpop.permute.xlu0 %583
  %585 = vrot.lane.b32.xlu0 %v493, 10
  %v586 = vpop.permute.xlu0 %585
  %587 = vrot.lane.b32.xlu0 %v495, 10
  %v588 = vpop.permute.xlu0 %587
  %593 = vrot.lane.b32.xlu0 %v488, 10
  %v594 = vpop.permute.xlu0 %593
  %595 = vrot.lane.b32.xlu0 %v490, 10
  %v596 = vpop.permute.xlu0 %595
  %597 = vrot.lane.b32.xlu0 %v492, 10
  %v598 = vpop.permute.xlu0 %597
  %599 = vrot.lane.b32.xlu0 %v494, 10
  %v600 = vpop.permute.xlu0 %599
  %vm601 = vcmask 80896
  %v602 = vsel %vm601, %v594, %v582
  %v603 = vsel %vm601, %v596, %v584
  %v604 = vsel %vm601, %v598, %v586
  %v605 = vsel %vm601, %v600, %v588
  %v614 = vsel %vm601, %v582, %v594
  %v615 = vsel %vm601, %v584, %v596
  %v616 = vsel %vm601, %v586, %v598
  %v617 = vsel %vm601, %v588, %v600
  %618 = vset.pattern.permute.xlu0 1
  %619 = vperm.xlu0 %618, %v496
  %v620 = vpop.permute.xlu0 %619
  %622 = vset.pattern.permute.xlu0 1
  %623 = vperm.xlu0 %622, %v497
  %v624 = vpop.permute.xlu0 %623
  %626 = vset.pattern.permute.xlu0 1
  %627 = vperm.xlu0 %626, %v498
  %v628 = vpop.permute.xlu0 %627
  %630 = vset.pattern.permute.xlu0 1
  %631 = vperm.xlu0 %630, %v499
  %v632 = vpop.permute.xlu0 %631
  %v634 = vmul.f32 %v620, %v614
  %v635 = vmul.f32 %v620, %v602
  %v636 = vmul.f32 %v624, %v615
  %v637 = vmul.f32 %v624, %v603
  %v638 = vmul.f32 %v628, %v616
  %v639 = vmul.f32 %v628, %v604
  %v640 = vmul.f32 %v632, %v617
  %v641 = vmul.f32 %v632, %v605
  %v642 = vadd.f32 %v573, %v634
  %v643 = vadd.f32 %v574, %v635
  %v644 = vadd.f32 %v575, %v636
  %v645 = vadd.f32 %v576, %v637
  %v646 = vadd.f32 %v577, %v638
  %v647 = vadd.f32 %v578, %v639
  %v648 = vadd.f32 %v579, %v640
  %v649 = vadd.f32 %v580, %v641
  %650 = vrot.lane.b32.xlu0 %v489, 9
  %v651 = vpop.permute.xlu0 %650
  %652 = vrot.lane.b32.xlu0 %v491, 9
  %v653 = vpop.permute.xlu0 %652
  %654 = vrot.lane.b32.xlu0 %v493, 9
  %v655 = vpop.permute.xlu0 %654
  %656 = vrot.lane.b32.xlu0 %v495, 9
  %v657 = vpop.permute.xlu0 %656
  %662 = vrot.lane.b32.xlu0 %v488, 9
  %v663 = vpop.permute.xlu0 %662
  %664 = vrot.lane.b32.xlu0 %v490, 9
  %v665 = vpop.permute.xlu0 %664
  %666 = vrot.lane.b32.xlu0 %v492, 9
  %v667 = vpop.permute.xlu0 %666
  %668 = vrot.lane.b32.xlu0 %v494, 9
  %v669 = vpop.permute.xlu0 %668
  %vm670 = vcmask 72704
  %v671 = vsel %vm670, %v663, %v651
  %v672 = vsel %vm670, %v665, %v653
  %v673 = vsel %vm670, %v667, %v655
  %v674 = vsel %vm670, %v669, %v657
  %v683 = vsel %vm670, %v651, %v663
  %v684 = vsel %vm670, %v653, %v665
  %v685 = vsel %vm670, %v655, %v667
  %v686 = vsel %vm670, %v657, %v669
  %687 = vset.pattern.permute.xlu0 2
  %688 = vperm.xlu0 %687, %v496
  %v689 = vpop.permute.xlu0 %688
  %691 = vset.pattern.permute.xlu0 2
  %692 = vperm.xlu0 %691, %v497
  %v693 = vpop.permute.xlu0 %692
  %695 = vset.pattern.permute.xlu0 2
  %696 = vperm.xlu0 %695, %v498
  %v697 = vpop.permute.xlu0 %696
  %699 = vset.pattern.permute.xlu0 2
  %700 = vperm.xlu0 %699, %v499
  %v701 = vpop.permute.xlu0 %700
  %v703 = vmul.f32 %v689, %v683
  %v704 = vmul.f32 %v689, %v671
  %v705 = vmul.f32 %v693, %v684
  %v706 = vmul.f32 %v693, %v672
  %v707 = vmul.f32 %v697, %v685
  %v708 = vmul.f32 %v697, %v673
  %v709 = vmul.f32 %v701, %v686
  %v710 = vmul.f32 %v701, %v674
  %v711 = vadd.f32 %v642, %v703
  %v712 = vadd.f32 %v643, %v704
  %v713 = vadd.f32 %v644, %v705
  %v714 = vadd.f32 %v645, %v706
  %v715 = vadd.f32 %v646, %v707
  %v716 = vadd.f32 %v647, %v708
  %v717 = vadd.f32 %v648, %v709
  %v718 = vadd.f32 %v649, %v710
  %719 = vrot.lane.b32.xlu0 %v489, 1
  %v720 = vpop.permute.xlu0 %719
  %721 = vrot.lane.b32.xlu0 %v491, 1
  %v722 = vpop.permute.xlu0 %721
  %723 = vrot.lane.b32.xlu0 %v493, 1
  %v724 = vpop.permute.xlu0 %723
  %725 = vrot.lane.b32.xlu0 %v495, 1
  %v726 = vpop.permute.xlu0 %725
  %731 = vrot.lane.b32.xlu0 %v488, 1
  %v732 = vpop.permute.xlu0 %731
  %733 = vrot.lane.b32.xlu0 %v490, 1
  %v734 = vpop.permute.xlu0 %733
  %735 = vrot.lane.b32.xlu0 %v492, 1
  %v736 = vpop.permute.xlu0 %735
  %737 = vrot.lane.b32.xlu0 %v494, 1
  %v738 = vpop.permute.xlu0 %737
  %vm739 = vcmask 7168
  %v740 = vsel %vm739, %v732, %v720
  %v741 = vsel %vm739, %v734, %v722
  %v742 = vsel %vm739, %v736, %v724
  %v743 = vsel %vm739, %v738, %v726
  %v752 = vsel %vm739, %v720, %v732
  %v753 = vsel %vm739, %v722, %v734
  %v754 = vsel %vm739, %v724, %v736
  %v755 = vsel %vm739, %v726, %v738
  %756 = vset.pattern.permute.xlu0 3
  %757 = vperm.xlu0 %756, %v496
  %v758 = vpop.permute.xlu0 %757
  %760 = vset.pattern.permute.xlu0 3
  %761 = vperm.xlu0 %760, %v497
  %v762 = vpop.permute.xlu0 %761
  %764 = vset.pattern.permute.xlu0 3
  %765 = vperm.xlu0 %764, %v498
  %v766 = vpop.permute.xlu0 %765
  %768 = vset.pattern.permute.xlu0 3
  %769 = vperm.xlu0 %768, %v499
  %v770 = vpop.permute.xlu0 %769
  %v772 = vmul.f32 %v758, %v752
  %v773 = vmul.f32 %v758, %v740
  %v774 = vmul.f32 %v762, %v753
  %v775 = vmul.f32 %v762, %v741
  %v776 = vmul.f32 %v766, %v754
  %v777 = vmul.f32 %v766, %v742
  %v778 = vmul.f32 %v770, %v755
  %v779 = vmul.f32 %v770, %v743
  %v780 = vadd.f32 %v711, %v772
  %v781 = vadd.f32 %v712, %v773
  %v782 = vadd.f32 %v713, %v774
  %v783 = vadd.f32 %v714, %v775
  %v784 = vadd.f32 %v715, %v776
  %v785 = vadd.f32 %v716, %v777
  %v786 = vadd.f32 %v717, %v778
  %v787 = vadd.f32 %v718, %v779
  %788 = vset.pattern.permute.xlu0 4
  %789 = vperm.xlu0 %788, %v496
  %v790 = vpop.permute.xlu0 %789
  %792 = vset.pattern.permute.xlu0 4
  %793 = vperm.xlu0 %792, %v497
  %v794 = vpop.permute.xlu0 %793
  %796 = vset.pattern.permute.xlu0 4
  %797 = vperm.xlu0 %796, %v498
  %v798 = vpop.permute.xlu0 %797
  %800 = vset.pattern.permute.xlu0 4
  %801 = vperm.xlu0 %800, %v499
  %v802 = vpop.permute.xlu0 %801
  %v804 = vmul.f32 %v790, %v488
  %v805 = vmul.f32 %v790, %v489
  %v806 = vmul.f32 %v794, %v490
  %v807 = vmul.f32 %v794, %v491
  %v808 = vmul.f32 %v798, %v492
  %v809 = vmul.f32 %v798, %v493
  %v810 = vmul.f32 %v802, %v494
  %v811 = vmul.f32 %v802, %v495
  %v812 = vadd.f32 %v780, %v804
  %v813 = vadd.f32 %v781, %v805
  %v814 = vadd.f32 %v782, %v806
  %v815 = vadd.f32 %v783, %v807
  %v816 = vadd.f32 %v784, %v808
  %v817 = vadd.f32 %v785, %v809
  %v818 = vadd.f32 %v786, %v810
  %v819 = vadd.f32 %v787, %v811
  %820 = vrot.lane.b32.xlu0 %v488, 127
  %v821 = vpop.permute.xlu0 %820
  %822 = vrot.lane.b32.xlu0 %v489, 127
  %v823 = vpop.permute.xlu0 %822
  %824 = vrot.lane.b32.xlu0 %v490, 127
  %v825 = vpop.permute.xlu0 %824
  %826 = vrot.lane.b32.xlu0 %v491, 127
  %v827 = vpop.permute.xlu0 %826
  %828 = vrot.lane.b32.xlu0 %v492, 127
  %v829 = vpop.permute.xlu0 %828
  %830 = vrot.lane.b32.xlu0 %v493, 127
  %v831 = vpop.permute.xlu0 %830
  %832 = vrot.lane.b32.xlu0 %v494, 127
  %v833 = vpop.permute.xlu0 %832
  %834 = vrot.lane.b32.xlu0 %v495, 127
  %v835 = vpop.permute.xlu0 %834
  %vm836 = vcmask 1039360
  %v837 = vsel %vm836, %v821, %v823
  %v838 = vsel %vm836, %v825, %v827
  %v839 = vsel %vm836, %v829, %v831
  %v840 = vsel %vm836, %v833, %v835
  %v853 = vsel %vm836, %v823, %v821
  %v854 = vsel %vm836, %v827, %v825
  %v855 = vsel %vm836, %v831, %v829
  %v856 = vsel %vm836, %v835, %v833
  %857 = vset.pattern.permute.xlu0 5
  %858 = vperm.xlu0 %857, %v496
  %v859 = vpop.permute.xlu0 %858
  %861 = vset.pattern.permute.xlu0 5
  %862 = vperm.xlu0 %861, %v497
  %v863 = vpop.permute.xlu0 %862
  %865 = vset.pattern.permute.xlu0 5
  %866 = vperm.xlu0 %865, %v498
  %v867 = vpop.permute.xlu0 %866
  %869 = vset.pattern.permute.xlu0 5
  %870 = vperm.xlu0 %869, %v499
  %v871 = vpop.permute.xlu0 %870
  %v873 = vmul.f32 %v859, %v837
  %v874 = vmul.f32 %v859, %v853
  %v875 = vmul.f32 %v863, %v838
  %v876 = vmul.f32 %v863, %v854
  %v877 = vmul.f32 %v867, %v839
  %v878 = vmul.f32 %v867, %v855
  %v879 = vmul.f32 %v871, %v840
  %v880 = vmul.f32 %v871, %v856
  %v881 = vadd.f32 %v812, %v873
  %v882 = vadd.f32 %v813, %v874
  %v883 = vadd.f32 %v814, %v875
  %v884 = vadd.f32 %v815, %v876
  %v885 = vadd.f32 %v816, %v877
  %v886 = vadd.f32 %v817, %v878
  %v887 = vadd.f32 %v818, %v879
  %v888 = vadd.f32 %v819, %v880
  %889 = vrot.lane.b32.xlu0 %v488, 119
  %v890 = vpop.permute.xlu0 %889
  %891 = vrot.lane.b32.xlu0 %v489, 119
  %v892 = vpop.permute.xlu0 %891
  %893 = vrot.lane.b32.xlu0 %v490, 119
  %v894 = vpop.permute.xlu0 %893
  %895 = vrot.lane.b32.xlu0 %v491, 119
  %v896 = vpop.permute.xlu0 %895
  %897 = vrot.lane.b32.xlu0 %v492, 119
  %v898 = vpop.permute.xlu0 %897
  %899 = vrot.lane.b32.xlu0 %v493, 119
  %v900 = vpop.permute.xlu0 %899
  %901 = vrot.lane.b32.xlu0 %v494, 119
  %v902 = vpop.permute.xlu0 %901
  %903 = vrot.lane.b32.xlu0 %v495, 119
  %v904 = vpop.permute.xlu0 %903
  %vm905 = vcmask 973824
  %v906 = vsel %vm905, %v890, %v892
  %v907 = vsel %vm905, %v894, %v896
  %v908 = vsel %vm905, %v898, %v900
  %v909 = vsel %vm905, %v902, %v904
  %v922 = vsel %vm905, %v892, %v890
  %v923 = vsel %vm905, %v896, %v894
  %v924 = vsel %vm905, %v900, %v898
  %v925 = vsel %vm905, %v904, %v902
  %926 = vset.pattern.permute.xlu0 6
  %927 = vperm.xlu0 %926, %v496
  %v928 = vpop.permute.xlu0 %927
  %930 = vset.pattern.permute.xlu0 6
  %931 = vperm.xlu0 %930, %v497
  %v932 = vpop.permute.xlu0 %931
  %934 = vset.pattern.permute.xlu0 6
  %935 = vperm.xlu0 %934, %v498
  %v936 = vpop.permute.xlu0 %935
  %938 = vset.pattern.permute.xlu0 6
  %939 = vperm.xlu0 %938, %v499
  %v940 = vpop.permute.xlu0 %939
  %v942 = vmul.f32 %v928, %v906
  %v943 = vmul.f32 %v928, %v922
  %v944 = vmul.f32 %v932, %v907
  %v945 = vmul.f32 %v932, %v923
  %v946 = vmul.f32 %v936, %v908
  %v947 = vmul.f32 %v936, %v924
  %v948 = vmul.f32 %v940, %v909
  %v949 = vmul.f32 %v940, %v925
  %v950 = vadd.f32 %v881, %v942
  %v951 = vadd.f32 %v882, %v943
  %v952 = vadd.f32 %v883, %v944
  %v953 = vadd.f32 %v884, %v945
  %v954 = vadd.f32 %v885, %v946
  %v955 = vadd.f32 %v886, %v947
  %v956 = vadd.f32 %v887, %v948
  %v957 = vadd.f32 %v888, %v949
  %958 = vrot.lane.b32.xlu0 %v488, 118
  %v959 = vpop.permute.xlu0 %958
  %960 = vrot.lane.b32.xlu0 %v489, 118
  %v961 = vpop.permute.xlu0 %960
  %962 = vrot.lane.b32.xlu0 %v490, 118
  %v963 = vpop.permute.xlu0 %962
  %964 = vrot.lane.b32.xlu0 %v491, 118
  %v965 = vpop.permute.xlu0 %964
  %966 = vrot.lane.b32.xlu0 %v492, 118
  %v967 = vpop.permute.xlu0 %966
  %968 = vrot.lane.b32.xlu0 %v493, 118
  %v969 = vpop.permute.xlu0 %968
  %970 = vrot.lane.b32.xlu0 %v494, 118
  %v971 = vpop.permute.xlu0 %970
  %972 = vrot.lane.b32.xlu0 %v495, 118
  %v973 = vpop.permute.xlu0 %972
  %vm974 = vcmask 965632
  %v975 = vsel %vm974, %v959, %v961
  %v976 = vsel %vm974, %v963, %v965
  %v977 = vsel %vm974, %v967, %v969
  %v978 = vsel %vm974, %v971, %v973
  %v991 = vsel %vm974, %v961, %v959
  %v992 = vsel %vm974, %v965, %v963
  %v993 = vsel %vm974, %v969, %v967
  %v994 = vsel %vm974, %v973, %v971
  %995 = vset.pattern.permute.xlu0 7
  %996 = vperm.xlu0 %995, %v496
  %v997 = vpop.permute.xlu0 %996
  %999 = vset.pattern.permute.xlu0 7
  %1000 = vperm.xlu0 %999, %v497
  %v1001 = vpop.permute.xlu0 %1000
  %1003 = vset.pattern.permute.xlu0 7
  %1004 = vperm.xlu0 %1003, %v498
  %v1005 = vpop.permute.xlu0 %1004
  %1007 = vset.pattern.permute.xlu0 7
  %1008 = vperm.xlu0 %1007, %v499
  %v1009 = vpop.permute.xlu0 %1008
  %v1011 = vmul.f32 %v997, %v975
  %v1012 = vmul.f32 %v997, %v991
  %v1013 = vmul.f32 %v1001, %v976
  %v1014 = vmul.f32 %v1001, %v992
  %v1015 = vmul.f32 %v1005, %v977
  %v1016 = vmul.f32 %v1005, %v993
  %v1017 = vmul.f32 %v1009, %v978
  %v1018 = vmul.f32 %v1009, %v994
  %v1019 = vadd.f32 %v950, %v1011
  %v1020 = vadd.f32 %v951, %v1012
  %v1021 = vadd.f32 %v952, %v1013
  %v1022 = vadd.f32 %v953, %v1014
  %v1023 = vadd.f32 %v954, %v1015
  %v1024 = vadd.f32 %v955, %v1016
  %v1025 = vadd.f32 %v956, %v1017
  %v1026 = vadd.f32 %v957, %v1018
  %1027 = vrot.lane.b32.xlu0 %v488, 117
  %v1028 = vpop.permute.xlu0 %1027
  %1029 = vrot.lane.b32.xlu0 %v489, 117
  %v1030 = vpop.permute.xlu0 %1029
  %1031 = vrot.lane.b32.xlu0 %v490, 117
  %v1032 = vpop.permute.xlu0 %1031
  %1033 = vrot.lane.b32.xlu0 %v491, 117
  %v1034 = vpop.permute.xlu0 %1033
  %1035 = vrot.lane.b32.xlu0 %v492, 117
  %v1036 = vpop.permute.xlu0 %1035
  %1037 = vrot.lane.b32.xlu0 %v493, 117
  %v1038 = vpop.permute.xlu0 %1037
  %1039 = vrot.lane.b32.xlu0 %v494, 117
  %v1040 = vpop.permute.xlu0 %1039
  %1041 = vrot.lane.b32.xlu0 %v495, 117
  %v1042 = vpop.permute.xlu0 %1041
  %vm1043 = vcmask 957440
  %v1044 = vsel %vm1043, %v1028, %v1030
  %v1045 = vsel %vm1043, %v1032, %v1034
  %v1046 = vsel %vm1043, %v1036, %v1038
  %v1047 = vsel %vm1043, %v1040, %v1042
  %v1060 = vsel %vm1043, %v1030, %v1028
  %v1061 = vsel %vm1043, %v1034, %v1032
  %v1062 = vsel %vm1043, %v1038, %v1036
  %v1063 = vsel %vm1043, %v1042, %v1040
  %1064 = vset.pattern.permute.xlu0 8
  %1065 = vperm.xlu0 %1064, %v496
  %v1066 = vpop.permute.xlu0 %1065
  %1068 = vset.pattern.permute.xlu0 8
  %1069 = vperm.xlu0 %1068, %v497
  %v1070 = vpop.permute.xlu0 %1069
  %1072 = vset.pattern.permute.xlu0 8
  %1073 = vperm.xlu0 %1072, %v498
  %v1074 = vpop.permute.xlu0 %1073
  %1076 = vset.pattern.permute.xlu0 8
  %1077 = vperm.xlu0 %1076, %v499
  %v1078 = vpop.permute.xlu0 %1077
  %v1080 = vmul.f32 %v1066, %v1044
  %v1081 = vmul.f32 %v1066, %v1060
  %v1082 = vmul.f32 %v1070, %v1045
  %v1083 = vmul.f32 %v1070, %v1061
  %v1084 = vmul.f32 %v1074, %v1046
  %v1085 = vmul.f32 %v1074, %v1062
  %v1086 = vmul.f32 %v1078, %v1047
  %v1087 = vmul.f32 %v1078, %v1063
  %v1088 = vadd.f32 %v1019, %v1080
  %v1089 = vadd.f32 %v1020, %v1081
  %v1090 = vadd.f32 %v1021, %v1082
  %v1091 = vadd.f32 %v1022, %v1083
  %v1092 = vadd.f32 %v1023, %v1084
  %v1093 = vadd.f32 %v1024, %v1085
  %v1094 = vadd.f32 %v1025, %v1086
  %v1095 = vadd.f32 %v1026, %v1087
  %v1096 = vmul.f32 %v1088, %v321
  %v1097 = vmul.f32 %v1089, %v325
  %v1098 = vmul.f32 %v1090, %v321
  %v1099 = vmul.f32 %v1091, %v325
  %v1100 = vmul.f32 %v1092, %v321
  %v1101 = vmul.f32 %v1093, %v325
  %v1102 = vmul.f32 %v1094, %v321
  %v1103 = vmul.f32 %v1095, %v325
  %v1104 = vadd.f32 %v1096, %v1097
  %1105 = vadd.xlane.f32.xlu0 %v1104
  %v1106 = vpop.xlane.xlu0 %1105
  %v1107 = vadd.f32 %v1098, %v1099
  %1108 = vadd.xlane.f32.xlu0 %v1107
  %v1109 = vpop.xlane.xlu0 %1108
  %v1110 = vadd.f32 %v1100, %v1101
  %1111 = vadd.xlane.f32.xlu0 %v1110
  %v1112 = vpop.xlane.xlu0 %1111
  %v1113 = vadd.f32 %v1102, %v1103
  %1114 = vadd.xlane.f32.xlu0 %v1113
  %v1115 = vpop.xlane.xlu0 %1114
  %v1116 = vmul.f32 %v1106, 0.0078125
  %v1117 = vmul.f32 %v1109, 0.0078125
  %v1118 = vmul.f32 %v1112, 0.0078125
  %v1119 = vmul.f32 %v1115, 0.0078125
  %v1120 = vmul.f32 %v1096, %v1096
  %v1121 = vmul.f32 %v1097, %v1097
  %v1122 = vmul.f32 %v1098, %v1098
  %v1123 = vmul.f32 %v1099, %v1099
  %v1124 = vmul.f32 %v1100, %v1100
  %v1125 = vmul.f32 %v1101, %v1101
  %v1126 = vmul.f32 %v1102, %v1102
  %v1127 = vmul.f32 %v1103, %v1103
  %v1128 = vadd.f32 %v1120, %v1121
  %1129 = vadd.xlane.f32.xlu0 %v1128
  %v1130 = vpop.xlane.xlu0 %1129
  %v1131 = vadd.f32 %v1122, %v1123
  %1132 = vadd.xlane.f32.xlu0 %v1131
  %v1133 = vpop.xlane.xlu0 %1132
  %v1134 = vadd.f32 %v1124, %v1125
  %1135 = vadd.xlane.f32.xlu0 %v1134
  %v1136 = vpop.xlane.xlu0 %1135
  %v1137 = vadd.f32 %v1126, %v1127
  %1138 = vadd.xlane.f32.xlu0 %v1137
  %v1139 = vpop.xlane.xlu0 %1138
  %v1140 = vmul.f32 %v1130, 0.0078125
  %v1141 = vmul.f32 %v1133, 0.0078125
  %v1142 = vmul.f32 %v1136, 0.0078125
  %v1143 = vmul.f32 %v1139, 0.0078125
  %v1144 = vmul.f32 %v1116, %v1116
  %v1145 = vmul.f32 %v1117, %v1117
  %v1146 = vmul.f32 %v1118, %v1118
  %v1147 = vmul.f32 %v1119, %v1119
  %v1148 = vsub.f32 %v1140, %v1144
  %v1149 = vsub.f32 %v1141, %v1145
  %v1150 = vsub.f32 %v1142, %v1146
  %v1151 = vsub.f32 %v1143, %v1147
  %v1152 = vadd.f32 %v1148, 1e-05
  %v1153 = vadd.f32 %v1149, 1e-05
  %v1154 = vadd.f32 %v1150, 1e-05
  %v1155 = vadd.f32 %v1151, 1e-05
  %v1156 = vrsqrt.pop %v1152
  %v1157 = vrsqrt.pop %v1153
  %v1158 = vrsqrt.pop %v1154
  %v1159 = vrsqrt.pop %v1155
  %v1160 = vmul.f32 %v384, %v1156
  %v1161 = vmul.f32 %v385, %v1157
  %v1162 = vmul.f32 %v386, %v1158
  %v1163 = vmul.f32 %v387, %v1159
  %v1164 = vmul.f32 %v1116, %v1160
  %v1165 = vmul.f32 %v1117, %v1161
  %v1166 = vmul.f32 %v1118, %v1162
  %v1167 = vmul.f32 %v1119, %v1163
  %1172 = vrot.lane.b32.xlu0 %v1164, 1
  %v1173 = vpop.permute.xlu0 %1172
  %1174 = vrot.lane.b32.xlu0 %v1165, 1
  %v1175 = vpop.permute.xlu0 %1174
  %1176 = vrot.lane.b32.xlu0 %v1166, 1
  %v1177 = vpop.permute.xlu0 %1176
  %1178 = vrot.lane.b32.xlu0 %v1167, 1
  %v1179 = vpop.permute.xlu0 %1178
  %v1184 = vsub.f32 %v384, %v1173
  %v1185 = vsub.f32 %v385, %v1175
  %v1186 = vsub.f32 %v386, %v1177
  %v1187 = vsub.f32 %v387, %v1179
  %1189 = vset.pattern.permute.xlu0 4
  %1190 = vperm.xlu0 %1189, %v1160
  %v1191 = vpop.permute.xlu0 %1190
  %1194 = vset.pattern.permute.xlu0 4
  %1195 = vperm.xlu0 %1194, %v1161
  %v1196 = vpop.permute.xlu0 %1195
  %1199 = vset.pattern.permute.xlu0 4
  %1200 = vperm.xlu0 %1199, %v1162
  %v1201 = vpop.permute.xlu0 %1200
  %1204 = vset.pattern.permute.xlu0 4
  %1205 = vperm.xlu0 %1204, %v1163
  %v1206 = vpop.permute.xlu0 %1205
  %v1208 = vmul.f32 %v1088, %v1191
  %v1209 = vmul.f32 %v1089, %v1191
  %v1210 = vmul.f32 %v1090, %v1196
  %v1211 = vmul.f32 %v1091, %v1196
  %v1212 = vmul.f32 %v1092, %v1201
  %v1213 = vmul.f32 %v1093, %v1201
  %v1214 = vmul.f32 %v1094, %v1206
  %v1215 = vmul.f32 %v1095, %v1206
  %1217 = vset.pattern.permute.xlu0 5
  %1218 = vperm.xlu0 %1217, %v1184
  %v1219 = vpop.permute.xlu0 %1218
  %1222 = vset.pattern.permute.xlu0 5
  %1223 = vperm.xlu0 %1222, %v1185
  %v1224 = vpop.permute.xlu0 %1223
  %1227 = vset.pattern.permute.xlu0 5
  %1228 = vperm.xlu0 %1227, %v1186
  %v1229 = vpop.permute.xlu0 %1228
  %1232 = vset.pattern.permute.xlu0 5
  %1233 = vperm.xlu0 %1232, %v1187
  %v1234 = vpop.permute.xlu0 %1233
  %v1236 = vadd.f32 %v1208, %v1219
  %v1237 = vadd.f32 %v1209, %v1219
  %v1238 = vadd.f32 %v1210, %v1224
  %v1239 = vadd.f32 %v1211, %v1224
  %v1240 = vadd.f32 %v1212, %v1229
  %v1241 = vadd.f32 %v1213, %v1229
  %v1242 = vadd.f32 %v1214, %v1234
  %v1243 = vadd.f32 %v1215, %v1234
  %v1244 = vmax.f32 %v1236, 0.0
  %v1245 = vmax.f32 %v1237, 0.0
  %v1246 = vmax.f32 %v1238, 0.0
  %v1247 = vmax.f32 %v1239, 0.0
  %v1248 = vmax.f32 %v1240, 0.0
  %v1249 = vmax.f32 %v1241, 0.0
  %v1250 = vmax.f32 %v1242, 0.0
  %v1251 = vmax.f32 %v1243, 0.0
  %v1252 = vld [vmem:[%s6] sm:$0xff]
  %v1253 = vld [vmem:[%s6 + $0x8] sm:$0xff]
  %v1255 = vsel %vm215, %v1252, 0
  %v1258 = vsel %vm215, %v1253, 0
  %1260 = vmatprep.subr.mxu0 %v1245
  %1261 = vmatpush1.msra.mxu0 %v1244
  %1262 = vmatprep.subr.mxu0 %v1247
  %1263 = vmatpush1.msra.mxu0 %v1246
  %1264 = vmatprep.subr.mxu0 %v1249
  %1265 = vmatpush1.msra.mxu0 %v1248
  %1266 = vmatprep.subr.mxu0 %v1251
  %1267 = vmatpush1.msra.mxu0 %v1250
  %1268 = vmatprep.subr.mxu0 0.0
  %1269 = vmatpush1.msra.mxu0 0.0
  %1270 = vmatprep.subr.mxu0 0.0
  %1271 = vmatpush1.msra.mxu0 0.0
  %1272 = vmatprep.subr.mxu0 0.0
  %1273 = vmatpush1.msra.mxu0 0.0
  %1274 = vmatprep.subr.mxu0 0.0
  %1275 = vmatpush1.msra.mxu0 0.0
  %1276 = vmatprep.subr.mxu0 0.0
  %1277 = vmatpush1.msra.mxu0 0.0
  %1278 = vmatprep.subr.mxu0 0.0
  %1279 = vmatpush1.msra.mxu0 0.0
  %1280 = vmatprep.subr.mxu0 0.0
  %1281 = vmatpush1.msra.mxu0 0.0
  %1282 = vmatprep.subr.mxu0 0.0
  %1283 = vmatpush1.msra.mxu0 0.0
  %1284 = vmatprep.subr.mxu0 0.0
  %1285 = vmatpush1.msra.mxu0 0.0
  %1286 = vmatprep.subr.mxu0 0.0
  %1287 = vmatpush1.msra.mxu0 0.0
  %1288 = vmatprep.subr.mxu0 0.0
  %1289 = vmatpush1.msra.mxu0 0.0
  %1290 = vmatprep.subr.mxu0 0.0
  %1291 = vmatpush1.msra.mxu0 0.0
  %1292 = vmatprep.subr.mxu0 0.0
  %1293 = vmatpush1.msra.mxu0 0.0
  %1294 = vmatprep.subr.mxu0 0.0
  %1295 = vmatpush1.msra.mxu0 0.0
  %1296 = vmatprep.subr.mxu0 0.0
  %1297 = vmatpush1.msra.mxu0 0.0
  %1298 = vmatprep.subr.mxu0 0.0
  %1299 = vmatpush1.msra.mxu0 0.0
  %1300 = vmatprep.subr.mxu0 0.0
  %1301 = vmatpush1.msra.mxu0 0.0
  %1302 = vmatprep.subr.mxu0 0.0
  %1303 = vmatpush1.msra.mxu0 0.0
  %1304 = vmatprep.subr.mxu0 0.0
  %1305 = vmatpush1.msra.mxu0 0.0
  %1306 = vmatprep.subr.mxu0 0.0
  %1307 = vmatpush1.msra.mxu0 0.0
  %1308 = vmatprep.subr.mxu0 0.0
  %1309 = vmatpush1.msra.mxu0 0.0
  %1310 = vmatprep.subr.mxu0 0.0
  %1311 = vmatpush1.msra.mxu0 0.0
  %1312 = vmatprep.subr.mxu0 0.0
  %1313 = vmatpush1.msra.mxu0 0.0
  %1314 = vmatprep.subr.mxu0 0.0
  %1315 = vmatpush1.msra.mxu0 0.0
  %1316 = vmatprep.subr.mxu0 0.0
  %1317 = vmatpush1.msra.mxu0 0.0
  %1318 = vmatprep.subr.mxu0 0.0
  %1319 = vmatpush1.msra.mxu0 0.0
  %1320 = vmatprep.subr.mxu0 0.0
  %1321 = vmatpush1.msra.mxu0 0.0
  %1322 = vmatprep.subr.mxu0 0.0
  %1323 = vmatpush1.msra.mxu0 0.0
  %1324 = vmatprep.mubr.f32.mxu0 0.0
  %1325 = vmatmul.mubr.f32.gmra.mrb[0].mxu0 %v1255
  %v1326 = vpop.f32.mrb[0].mxu0
  %v1327 = vadd.f32 0.0, %v1326
  %v1328 = vpop.f32.mrb[0].mxu0
  %v1329 = vadd.f32 0.0, %v1328
  %1330 = vmatprep.mubr.f32.mxu0 0.0
  %1331 = vmatmul.mubr.f32.gmra.mrb[0].mxu0 %v1258
  %v1332 = vpop.f32.mrb[0].mxu0
  %v1333 = vadd.f32 0.0, %v1332
  %v1334 = vpop.f32.mrb[0].mxu0
  %v1335 = vadd.f32 0.0, %v1334
  %1336 = vdwg.mxu0
  %v1337 = vmul.f32 %v1327, %v321
  %v1338 = vmul.f32 %v1329, %v325
  %v1339 = vmul.f32 %v1333, %v321
  %v1340 = vmul.f32 %v1335, %v325
  %v1341 = vadd.f32 %v1337, %v1338
  %1342 = vadd.xlane.f32.xlu0 %v1341
  %v1343 = vpop.xlane.xlu0 %1342
  %v1344 = vadd.f32 %v1339, %v1340
  %1345 = vadd.xlane.f32.xlu0 %v1344
  %v1346 = vpop.xlane.xlu0 %1345
  %v1347 = vmul.f32 %v1343, 0.0078125
  %v1348 = vmul.f32 %v1346, 0.0078125
  %v1349 = vmul.f32 %v1337, %v1337
  %v1350 = vmul.f32 %v1338, %v1338
  %v1351 = vmul.f32 %v1339, %v1339
  %v1352 = vmul.f32 %v1340, %v1340
  %v1353 = vadd.f32 %v1349, %v1350
  %1354 = vadd.xlane.f32.xlu0 %v1353
  %v1355 = vpop.xlane.xlu0 %1354
  %v1356 = vadd.f32 %v1351, %v1352
  %1357 = vadd.xlane.f32.xlu0 %v1356
  %v1358 = vpop.xlane.xlu0 %1357
  %v1359 = vmul.f32 %v1355, 0.0078125
  %v1360 = vmul.f32 %v1358, 0.0078125
  %v1361 = vmul.f32 %v1347, %v1347
  %v1362 = vmul.f32 %v1348, %v1348
  %v1363 = vsub.f32 %v1359, %v1361
  %v1364 = vsub.f32 %v1360, %v1362
  %v1365 = vld [vmem:[%s7] sm:$0xff]
  %v1366 = vld [vmem:[%s7 + $0x8] sm:$0xff]
  %v1367 = vadd.f32 %v1363, 1e-05
  %v1368 = vadd.f32 %v1364, 1e-05
  %v1369 = vrsqrt.pop %v1367
  %v1370 = vrsqrt.pop %v1368
  %v1371 = vmul.f32 %v1365, %v1369
  %v1372 = vmul.f32 %v1366, %v1370
  %v1373 = vmul.f32 %v1347, %v1371
  %v1374 = vmul.f32 %v1348, %v1372
  %1377 = vrot.lane.b32.xlu0 %v1373, 1
  %v1378 = vpop.permute.xlu0 %1377
  %1379 = vrot.lane.b32.xlu0 %v1374, 1
  %v1380 = vpop.permute.xlu0 %1379
  %v1383 = vsub.f32 %v1365, %v1378
  %v1384 = vsub.f32 %v1366, %v1380
  %1386 = vset.pattern.permute.xlu0 6
  %1387 = vperm.xlu0 %1386, %v1371
  %v1388 = vpop.permute.xlu0 %1387
  %1391 = vset.pattern.permute.xlu0 6
  %1392 = vperm.xlu0 %1391, %v1372
  %v1393 = vpop.permute.xlu0 %1392
  %v1395 = vmul.f32 %v1327, %v1388
  %v1396 = vmul.f32 %v1329, %v1388
  %v1397 = vmul.f32 %v1333, %v1393
  %v1398 = vmul.f32 %v1335, %v1393
  %1400 = vset.pattern.permute.xlu0 7
  %1401 = vperm.xlu0 %1400, %v1383
  %v1402 = vpop.permute.xlu0 %1401
  %1405 = vset.pattern.permute.xlu0 7
  %1406 = vperm.xlu0 %1405, %v1384
  %v1407 = vpop.permute.xlu0 %1406
  %v1409 = vadd.f32 %v1395, %v1402
  %v1410 = vadd.f32 %v1396, %v1402
  %v1411 = vadd.f32 %v1397, %v1407
  %v1412 = vadd.f32 %v1398, %v1407
  %v1413 = vmax.f32 %v1409, 0.0
  %v1414 = vmax.f32 %v1410, 0.0
  %v1415 = vmax.f32 %v1411, 0.0
  %v1416 = vmax.f32 %v1412, 0.0
  %1417 = vst [vmem:[%s8] sm:$0xff] %v1413
  %1418 = vst [vmem:[%s8 + $0x8] sm:$0xff] %v1414
  %1419 = vst [vmem:[%s8 + $0x10] sm:$0xff] %v1415
  %1420 = vst [vmem:[%s8 + $0x18] sm:$0xff] %v1416
  // Predicated region
  $region34: #{primary_module_forward.1} parent=0 // pred_check
    _
  $region35: #{primary_module_forward.1} parent=0 // pred_check_branch
    %1422 = sbr.rel (0) target = $region37
  $region36: #{primary_module_forward.1} parent=0 // pred_region
    _
  $region37: #{primary_module_forward.1} parent=0 // pred_fallthru
    _
  // Predicated region
  $region38: #{primary_module_forward.1} parent=0 // pred_check
    _
  $region39: #{primary_module_forward.1} parent=0 // pred_check_branch
    %1424 = sbr.rel (0) target = $region41
  $region40: #{primary_module_forward.1} parent=0 // pred_region
    _
  $region41: #{primary_module_forward.1} parent=0 // pred_fallthru
    _

</llo_original>
